<compile_context>
chip_gen: v5e
topology: v5e:2x2
jax: 0.10.0
libtpu: 0.0.40
codegen_flags: <defaults>
</compile_context>

<pallas_src>
import functools

import jax
import jax.numpy as jnp
from jax import lax
from jax.experimental import pallas as pl
from jax.experimental.pallas import tpu as pltpu

LANE = 128
EPS = 1e-5          # BatchNorm2d default eps


def _round_up(x, m):
    return (x + m - 1) // m * m


def _chip_config():
    # VMEM budget / row tile derived from the chip: v7x has 64 MiB per TensorCore,
    # v5e/v6e have 128 MiB.  Fallback is the conservative v7x setting.
    try:
        cap = int(pltpu.get_tpu_info().vmem_capacity_bytes)
    except Exception:
        cap = 64 * 1024 * 1024
    vmem_limit = min(cap * 5 // 8, 64 * 1024 * 1024)
    row_tile = 256 if cap <= 64 * 1024 * 1024 else 512
    return vmem_limit, row_tile


_VMEM_LIMIT, _ROW_TILE = _chip_config()


def _cparams():
    return pltpu.CompilerParams(
        dimension_semantics=("parallel",),
        vmem_limit_bytes=_VMEM_LIMIT)


def _tiling(m, row_tile):
    # Split the row axis into >= 2 tiles when possible so the "parallel" grid axis can feed both
    # TensorCores on v7x; keep each tile <= row_tile and a multiple of 16 (bf16 sublane tile).
    n_tiles = max(pl.cdiv(m, row_tile), 2 if m >= 32 else 1)
    tm = _round_up(pl.cdiv(m, n_tiles), 16)
    grid_m = pl.cdiv(m, tm)
    return tm, grid_m, grid_m * tm


# ---------------------------------------------------------------------------
# Kernels
# ---------------------------------------------------------------------------
def _conv_stats_kernel(p_ref, w_ref, conv_ref, sum_ref, sumsq_ref):
    # p_ref:    (TM, KKCp)  bf16 im2col tile (contraction dim zero-padded to 128k)
    # w_ref:    (KKCp, CP)  bf16 folded weights (same block every step -> VMEM resident)
    # conv_ref: (TM, CP)    bf16 raw conv tile (pre-BN; lane-dense)
    # sum_ref / sumsq_ref: (1, 1, CP) f32 per-tile BatchNorm partials (reduced in f32)
    conv = jnp.dot(p_ref[...], w_ref[...], preferred_element_type=jnp.float32)
    conv_ref[...] = conv.astype(conv_ref.dtype)
    sum_ref[...] = jnp.sum(conv, axis=0, keepdims=True)[None]
    sumsq_ref[...] = jnp.sum(conv * conv, axis=0, keepdims=True)[None]


def _combine_kernel(c1_ref, s1_ref, h1_ref, cb_ref, s2_ref, h2_ref, o_ref, *, cout, cpo):
    # Fused: out = relu(bn(conv1)) + relu(bn(branch1)) + relu(bn(branch2)) + relu(bn(branch3)).
    # conv1's BN+ReLU is applied inline (raw bf16 slab + scale/shift), and the three branches
    # live side-by-side on cb_ref's channel axis (merged 7x7-tap matmul output).
    u = jnp.maximum(c1_ref[...].astype(jnp.float32) * s1_ref[...] + h1_ref[...], 0.0)
    yb = jnp.maximum(cb_ref[...].astype(jnp.float32) * s2_ref[...] + h2_ref[...], 0.0)
    out = (u[:, :cout] + yb[:, :cout]
           + yb[:, cout:2 * cout] + yb[:, 2 * cout:3 * cout])
    if cpo > cout:
        out = jnp.concatenate(
            [out, jnp.zeros((out.shape[0], cpo - cout), jnp.float32)], axis=-1)
    o_ref[...] = out


# ---------------------------------------------------------------------------
# Wrappers
# ---------------------------------------------------------------------------
def _conv_stats_call(patches, w, tm, grid_m):
    m_pad, kkcp = patches.shape
    cp = w.shape[1]
    return pl.pallas_call(
        _conv_stats_kernel,
        grid=(grid_m,),
        in_specs=[pl.BlockSpec((tm, kkcp), lambda i: (i, 0)),
                  pl.BlockSpec((kkcp, cp), lambda i: (0, 0))],
        out_specs=(pl.BlockSpec((tm, cp), lambda i: (i, 0)),
                   pl.BlockSpec((1, 1, cp), lambda i: (i, 0, 0)),
                   pl.BlockSpec((1, 1, cp), lambda i: (i, 0, 0))),
        out_shape=(jax.ShapeDtypeStruct((m_pad, cp), jnp.bfloat16),
                   jax.ShapeDtypeStruct((grid_m, 1, cp), jnp.float32),
                   jax.ShapeDtypeStruct((grid_m, 1, cp), jnp.float32)),
        compiler_params=_cparams(),
    )(patches, w)


def _bn_fold(sums, sumsqs, gamma, beta, cp, m, eps):
    # O(C) epilogue: fold per-tile partials into BN scale/shift.  var = E[x^2] - mean^2,
    # clamped >= 0.  Dropping the conv bias is exact: training-mode BN subtracts the per-channel
    # batch mean, cancelling any per-channel constant; zero row-padding is exact because padded
    # rows contribute 0 to the sums and we divide by the true M.
    total = jnp.sum(sums[:, 0, :], axis=0)
    total_sq = jnp.sum(sumsqs[:, 0, :], axis=0)
    mean = total / m
    var = jnp.maximum(total_sq / m - mean * mean, 0.0)
    inv_std = lax.rsqrt(var + eps)
    g = jnp.pad(gamma.astype(jnp.float32), (0, cp - gamma.shape[0]))
    b = jnp.pad(beta.astype(jnp.float32), (0, cp - beta.shape[0]))
    scale = (g * inv_std).reshape(1, cp)
    shift = (b - mean * g * inv_std).reshape(1, cp)
    return scale, shift


def _im2col(x_nhwc, k):
    # "same"-padded patches (N*H*W, k*k*C), built in bf16 so the XLA pad/slice/concat chain
    # moves half the bytes.
    n, h, w, c = x_nhwc.shape
    pad = (k - 1) // 2
    xp = jnp.pad(x_nhwc, ((0, 0), (pad, pad), (pad, pad), (0, 0)))
    cols = [xp[:, dy:dy + h, dx:dx + w, :] for dy in range(k) for dx in range(k)]
    return jnp.concatenate(cols, axis=-1).reshape(n * h * w, k * k * c)


def _fold_weight(w_oihw, kkcp, cp):
    # (O, I, Kh, Kw) -> (Kh*Kw*I, O), matching _im2col's (dy, dx, cin) ordering; zero-pad the
    # contraction dim (full-width MXU K loop) and the output-channel dim (lane-dense output).
    o = w_oihw.shape[0]
    kkc = w_oihw.shape[1] * w_oihw.shape[2] * w_oihw.shape[3]
    w = jnp.transpose(w_oihw, (2, 3, 1, 0)).reshape(kkc, o)
    return jnp.pad(w, ((0, kkcp - kkc), (0, cp - o))).astype(jnp.bfloat16)


def _merged_branch_weights(params):
    # Zero-pad the 3x3 / 5x5 taps to 7x7 (centered) — mathematically identical to the smaller
    # "same"-padded convs — and concatenate the three branches along output channels so one
    # patch build + one MXU pass computes conv2_1 | conv2_2 | conv2_3.
    ws, gs, bs = [], [], []
    for name in ("conv2_1", "conv2_2", "conv2_3"):
        w = params[name]["w"]
        p = (7 - w.shape[-1]) // 2
        ws.append(jnp.pad(w, ((0, 0), (0, 0), (p, p), (p, p))))
        gs.append(params[name]["gamma"])
        bs.append(params[name]["beta"])
    return jnp.concatenate(ws, axis=0), jnp.concatenate(gs), jnp.concatenate(bs)


def attn_conv_nhwc(x_nhwc_bf16, params, *, eps=EPS):
    n, h, w, cin = x_nhwc_bf16.shape
    cmid = params["conv1"]["w"].shape[0]
    cout = params["conv2_1"]["w"].shape[0]
    assert cmid == cout, "AttnConv residual (u + x) requires mid_channels == out_channels"

    m = n * h * w
    tm, grid_m, m_pad = _tiling(m, _ROW_TILE)
    cp1 = _round_up(cmid, LANE)
    cp2 = _round_up(3 * cout, LANE)   # lands on 256 (full v6e/v7x MXU width) once 3*cout > 128
    cpo = _round_up(cout, LANE)

    # ---- conv1: one folded im2col matmul + BN batch-stat partials ---------------------------
    k1 = params["conv1"]["w"].shape[-1]
    kkc1p = _round_up(k1 * k1 * cin, LANE)
    p1 = _im2col(x_nhwc_bf16, k1)
    p1 = jnp.pad(p1, ((0, m_pad - m), (0, kkc1p - p1.shape[1])))
    w1 = _fold_weight(params["conv1"]["w"], kkc1p, cp1)
    conv1_slab, s1, q1 = _conv_stats_call(p1, w1, tm, grid_m)
    scale1, shift1 = _bn_fold(s1, q1, params["conv1"]["gamma"], params["conv1"]["beta"],
                              cp1, m, eps)

    # ---- u = relu(bn(conv1)), consumed only inside the branch patch gather (XLA fuses the
    #      scale/shift + relu into the im2col; no standalone BN/ReLU pass, no post-BN HBM slab)
    u_rows = jnp.maximum(
        conv1_slab[:m, :cmid].astype(jnp.float32) * scale1[:, :cmid] + shift1[:, :cmid],
        0.0).astype(jnp.bfloat16)
    u_img = u_rows.reshape(n, h, w, cmid)

    # ---- the three branches as ONE 7x7-tap matmul + BN partials -----------------------------
    w2, g2, b2 = _merged_branch_weights(params)
    kkc2p = _round_up(49 * cmid, LANE)
    p2 = _im2col(u_img, 7)
    p2 = jnp.pad(p2, ((0, m_pad - m), (0, kkc2p - p2.shape[1])))
    w2f = _fold_weight(w2, kkc2p, cp2)
    convb_slab, s2, q2 = _conv_stats_call(p2, w2f, tm, grid_m)
    scale2, shift2 = _bn_fold(s2, q2, g2, b2, cp2, m, eps)

    # ---- fused BN+ReLU of conv1 and all branches + residual add, one pass -------------------
    row1 = pl.BlockSpec((tm, cp1), lambda i: (i, 0))
    vec1 = pl.BlockSpec((1, cp1), lambda i: (0, 0))
    row2 = pl.BlockSpec((tm, cp2), lambda i: (i, 0))
    vec2 = pl.BlockSpec((1, cp2), lambda i: (0, 0))
    out_slab = pl.pallas_call(
        functools.partial(_combine_kernel, cout=cout, cpo=cpo),
        grid=(grid_m,),
        in_specs=[row1, vec1, vec1, row2, vec2, vec2],
        out_specs=pl.BlockSpec((tm, cpo), lambda i: (i, 0)),
        out_shape=jax.ShapeDtypeStruct((m_pad, cpo), jnp.float32),
        compiler_params=_cparams(),
    )(conv1_slab, scale1, shift1, convb_slab, scale2, shift2)

    # TODO(synk): the original forward also evaluates self.final_conv(x) and discards the value;
    # its only effect is that BatchNorm's running-stat mutation, which a pure forward can't model.
    return out_slab[:m, :cout].reshape(n, h, w, cout)


def down_c_forward(x_nchw, params, *, eps=EPS):
    # NCHW -> NHWC once; 2x2 max-pool as plain jnp so XLA fuses it with the transpose and the
    # conv1 patch gather (no lane-sparse pooling kernel, no extra HBM round trip).
    x = jnp.transpose(x_nchw, (0, 2, 3, 1)).astype(jnp.float32)
    n, h, w, c = x.shape
    xp = x.reshape(n, h // 2, 2, w // 2, 2, c).max(axis=(2, 4)).astype(jnp.bfloat16)
    y = attn_conv_nhwc(xp, params, eps=eps)
    return jnp.transpose(y, (0, 3, 1, 2))


# ---------------------------------------------------------------------------
# fp32 XLA reference (mirrors the PyTorch module, including the conv bias)
# ---------------------------------------------------------------------------
def _conv_bn_relu_ref(x_nchw, p, eps=EPS):
    k = p["w"].shape[-1]
    pad = (k - 1) // 2
    conv = lax.conv_general_dilated(x_nchw, p["w"], (1, 1), ((pad, pad), (pad, pad)),
                                    dimension_numbers=("NCHW", "OIHW", "NCHW"))
    conv = conv + p["b"][None, :, None, None]
    mean = conv.mean(axis=(0, 2, 3), keepdims=True)
    var = ((conv - mean) ** 2).mean(axis=(0, 2, 3), keepdims=True)   # biased, BN training mode
    y = (conv - mean) / jnp.sqrt(var + eps) * p["gamma"][None, :, None, None] \
        + p["beta"][None, :, None, None]
    return jnp.maximum(y, 0.0)


def _down_c_ref(x_nchw, params, eps=EPS):
    N, C, H, W = x_nchw.shape
    xp = x_nchw.reshape(N, C, H // 2, 2, W // 2, 2).max(axis=(3, 5))
    u = _conv_bn_relu_ref(xp, params["conv1"], eps)
    s = (_conv_bn_relu_ref(u, params["conv2_1"], eps)
         + _conv_bn_relu_ref(u, params["conv2_2"], eps)
         + _conv_bn_relu_ref(u, params["conv2_3"], eps))
    return u + s     # final_conv's result is discarded by the original forward


def _init_conv_params(key, cin, cout, k):
    kw, kb = jax.random.split(key)
    bound = 1.0 / float(cin * k * k) ** 0.5
    return {
        "w": jax.random.uniform(kw, (cout, cin, k, k), minval=-bound, maxval=bound,
                                dtype=jnp.float32),
        "b": jax.random.uniform(kb, (cout,), minval=-bound, maxval=bound, dtype=jnp.float32),
        "gamma": jnp.ones((cout,), jnp.float32),
        "beta": jnp.zeros((cout,), jnp.float32),
    }


if __name__ == "__main__":
    key = jax.random.PRNGKey(0)
    k_x, k1, k2, k3, k4 = jax.random.split(key, 5)

    N, Cin, H, W = 2, 4, 16, 16
    Cout = 8     # AttnConv: mid_channels == out_channels

    x = jax.random.normal(k_x, (N, Cin, H, W), dtype=jnp.float32)
    params = {
        "conv1": _init_conv_params(k1, Cin, Cout, 3),
        "conv2_1": _init_conv_params(k2, Cout, Cout, 3),
        "conv2_2": _init_conv_params(k3, Cout, Cout, 5),
        "conv2_3": _init_conv_params(k4, Cout, Cout, 7),
        # final_conv params omitted: its output is discarded by the original forward.
    }

    out = jax.block_until_ready(jax.jit(down_c_forward)(x, params))
    assert out.shape == (N, Cout, H // 2, W // 2), out.shape

    ref = _down_c_ref(x, params)
    # bf16 MXU operands and bf16 intermediate slabs through two conv layers vs. an fp32 ref.
    assert jnp.allclose(out, ref, rtol=1e-1, atol=1e-1), float(jnp.max(jnp.abs(out - ref)))

    print("KERNEL_OK")
</pallas_src>

<mosaic_0001>
module attributes {stable_mosaic.version = 11 : i64} {
  func.func @_conv_stats_kernel(%arg0: i32, %arg1: memref<64x128xbf16, #tpu.memory_space<vmem>>, %arg2: memref<128x128xbf16, #tpu.memory_space<vmem>>, %arg3: memref<64x128xbf16, #tpu.memory_space<vmem>>, %arg4: memref<1x1x128xf32, #tpu.memory_space<vmem>>, %arg5: memref<1x1x128xf32, #tpu.memory_space<vmem>>) attributes {dimension_semantics = [#tpu.dimension_semantics<parallel>], iteration_bounds = array<i64: 2>, scalar_prefetch = 0 : i64, scratch_operands = 0 : i64, tpu.core_type = #tpu.core_type<tc>, window_params = [{transform_indices = @transform_0, window_bounds = array<i64: 64, 128>}, {pipeline_mode = #tpu.pipeline_mode<synchronous>, transform_indices = @transform_1, window_bounds = array<i64: 128, 128>}, {transform_indices = @transform_2, window_bounds = array<i64: 64, 128>}, {transform_indices = @transform_3, window_bounds = array<i64: 1, 1, 128>}, {transform_indices = @transform_4, window_bounds = array<i64: 1, 1, 128>}]} {
    %c0 = arith.constant 0 : index
    %c0_0 = arith.constant 0 : index
    %0 = vector.load %arg1[%c0, %c0_0] : memref<64x128xbf16, #tpu.memory_space<vmem>>, vector<64x128xbf16>
    %c0_1 = arith.constant 0 : index
    %c0_2 = arith.constant 0 : index
    %1 = vector.load %arg2[%c0_1, %c0_2] : memref<128x128xbf16, #tpu.memory_space<vmem>>, vector<128x128xbf16>
    %cst = arith.constant dense<0.000000e+00> : vector<64x128xf32>
    %2 = tpu.matmul %0, %1, %cst {dimension_numbers = #tpu.dot_dimension_numbers<[1], [0], [0], [1], [0, 0, 1, 1], [], []>} : vector<64x128xbf16>, vector<128x128xbf16>, vector<64x128xf32> -> vector<64x128xf32>
    %3 = arith.truncf %2 : vector<64x128xf32> to vector<64x128xbf16>
    %c0_3 = arith.constant 0 : index
    %c0_4 = arith.constant 0 : index
    %4 = vector.load %arg3[%c0_3, %c0_4] : memref<64x128xbf16, #tpu.memory_space<vmem>>, vector<64x128xbf16>
    tpu.vector_store %arg3[%c0_3, %c0_4], %3 {strides = array<i32>} : memref<64x128xbf16, #tpu.memory_space<vmem>>, vector<64x128xbf16>,
    %cst_5 = arith.constant dense<0.000000e+00> : vector<128xf32>
    %5 = vector.multi_reduction <add>, %2, %cst_5 [0] : vector<64x128xf32> to vector<128xf32>
    %6 = vector.shape_cast %5 : vector<128xf32> to vector<1x128xf32>
    %7 = vector.shape_cast %6 : vector<1x128xf32> to vector<1x1x128xf32>
    %c0_6 = arith.constant 0 : index
    %c0_7 = arith.constant 0 : index
    %c0_8 = arith.constant 0 : index
    %8 = vector.load %arg4[%c0_6, %c0_7, %c0_8] : memref<1x1x128xf32, #tpu.memory_space<vmem>>, vector<1x1x128xf32>
    tpu.vector_store %arg4[%c0_6, %c0_7, %c0_8], %7 {strides = array<i32>} : memref<1x1x128xf32, #tpu.memory_space<vmem>>, vector<1x1x128xf32>,
    %9 = arith.mulf %2, %2 : vector<64x128xf32>
    %cst_9 = arith.constant dense<0.000000e+00> : vector<128xf32>
    %10 = vector.multi_reduction <add>, %9, %cst_9 [0] : vector<64x128xf32> to vector<128xf32>
    %11 = vector.shape_cast %10 : vector<128xf32> to vector<1x128xf32>
    %12 = vector.shape_cast %11 : vector<1x128xf32> to vector<1x1x128xf32>
    %c0_10 = arith.constant 0 : index
    %c0_11 = arith.constant 0 : index
    %c0_12 = arith.constant 0 : index
    %13 = vector.load %arg5[%c0_10, %c0_11, %c0_12] : memref<1x1x128xf32, #tpu.memory_space<vmem>>, vector<1x1x128xf32>
    tpu.vector_store %arg5[%c0_10, %c0_11, %c0_12], %12 {strides = array<i32>} : memref<1x1x128xf32, #tpu.memory_space<vmem>>, vector<1x1x128xf32>,
    return
  }
  func.func @transform_0(%arg0: i32) -> (i32, i32) {
    %c0_i32 = arith.constant 0 : i32
    %c0_i32_0 = arith.constant 0 : i32
    return %arg0, %c0_i32 : i32, i32
  }
  func.func @transform_1(%arg0: i32) -> (i32, i32) {
    %c0_i32 = arith.constant 0 : i32
    %c0_i32_0 = arith.constant 0 : i32
    %c0_i32_1 = arith.constant 0 : i32
    return %c0_i32, %c0_i32_0 : i32, i32
  }
  func.func @transform_2(%arg0: i32) -> (i32, i32) {
    %c0_i32 = arith.constant 0 : i32
    %c0_i32_0 = arith.constant 0 : i32
    return %arg0, %c0_i32 : i32, i32
  }
  func.func @transform_3(%arg0: i32) -> (i32, i32, i32) {
    %c0_i32 = arith.constant 0 : i32
    %c0_i32_0 = arith.constant 0 : i32
    %c0_i32_1 = arith.constant 0 : i32
    return %arg0, %c0_i32, %c0_i32_0 : i32, i32, i32
  }
  func.func @transform_4(%arg0: i32) -> (i32, i32, i32) {
    %c0_i32 = arith.constant 0 : i32
    %c0_i32_0 = arith.constant 0 : i32
    %c0_i32_1 = arith.constant 0 : i32
    return %arg0, %c0_i32, %c0_i32_0 : i32, i32, i32
  }
}

module attributes {stable_mosaic.version = 11 : i64} {
  func.func @_conv_stats_kernel(%arg0: i32, %arg1: memref<64x512xbf16, #tpu.memory_space<vmem>>, %arg2: memref<512x128xbf16, #tpu.memory_space<vmem>>, %arg3: memref<64x128xbf16, #tpu.memory_space<vmem>>, %arg4: memref<1x1x128xf32, #tpu.memory_space<vmem>>, %arg5: memref<1x1x128xf32, #tpu.memory_space<vmem>>) attributes {dimension_semantics = [#tpu.dimension_semantics<parallel>], iteration_bounds = array<i64: 2>, scalar_prefetch = 0 : i64, scratch_operands = 0 : i64, tpu.core_type = #tpu.core_type<tc>, window_params = [{transform_indices = @transform_0, window_bounds = array<i64: 64, 512>}, {pipeline_mode = #tpu.pipeline_mode<synchronous>, transform_indices = @transform_1, window_bounds = array<i64: 512, 128>}, {transform_indices = @transform_2, window_bounds = array<i64: 64, 128>}, {transform_indices = @transform_3, window_bounds = array<i64: 1, 1, 128>}, {transform_indices = @transform_4, window_bounds = array<i64: 1, 1, 128>}]} {
    %c0 = arith.constant 0 : index
    %c0_0 = arith.constant 0 : index
    %0 = vector.load %arg1[%c0, %c0_0] : memref<64x512xbf16, #tpu.memory_space<vmem>>, vector<64x512xbf16>
    %c0_1 = arith.constant 0 : index
    %c0_2 = arith.constant 0 : index
    %1 = vector.load %arg2[%c0_1, %c0_2] : memref<512x128xbf16, #tpu.memory_space<vmem>>, vector<512x128xbf16>
    %cst = arith.constant dense<0.000000e+00> : vector<64x128xf32>
    %2 = tpu.matmul %0, %1, %cst {dimension_numbers = #tpu.dot_dimension_numbers<[1], [0], [0], [1], [0, 0, 1, 1], [], []>} : vector<64x512xbf16>, vector<512x128xbf16>, vector<64x128xf32> -> vector<64x128xf32>
    %3 = arith.truncf %2 : vector<64x128xf32> to vector<64x128xbf16>
    %c0_3 = arith.constant 0 : index
    %c0_4 = arith.constant 0 : index
    %4 = vector.load %arg3[%c0_3, %c0_4] : memref<64x128xbf16, #tpu.memory_space<vmem>>, vector<64x128xbf16>
    tpu.vector_store %arg3[%c0_3, %c0_4], %3 {strides = array<i32>} : memref<64x128xbf16, #tpu.memory_space<vmem>>, vector<64x128xbf16>,
    %cst_5 = arith.constant dense<0.000000e+00> : vector<128xf32>
    %5 = vector.multi_reduction <add>, %2, %cst_5 [0] : vector<64x128xf32> to vector<128xf32>
    %6 = vector.shape_cast %5 : vector<128xf32> to vector<1x128xf32>
    %7 = vector.shape_cast %6 : vector<1x128xf32> to vector<1x1x128xf32>
    %c0_6 = arith.constant 0 : index
    %c0_7 = arith.constant 0 : index
    %c0_8 = arith.constant 0 : index
    %8 = vector.load %arg4[%c0_6, %c0_7, %c0_8] : memref<1x1x128xf32, #tpu.memory_space<vmem>>, vector<1x1x128xf32>
    tpu.vector_store %arg4[%c0_6, %c0_7, %c0_8], %7 {strides = array<i32>} : memref<1x1x128xf32, #tpu.memory_space<vmem>>, vector<1x1x128xf32>,
    %9 = arith.mulf %2, %2 : vector<64x128xf32>
    %cst_9 = arith.constant dense<0.000000e+00> : vector<128xf32>
    %10 = vector.multi_reduction <add>, %9, %cst_9 [0] : vector<64x128xf32> to vector<128xf32>
    %11 = vector.shape_cast %10 : vector<128xf32> to vector<1x128xf32>
    %12 = vector.shape_cast %11 : vector<1x128xf32> to vector<1x1x128xf32>
    %c0_10 = arith.constant 0 : index
    %c0_11 = arith.constant 0 : index
    %c0_12 = arith.constant 0 : index
    %13 = vector.load %arg5[%c0_10, %c0_11, %c0_12] : memref<1x1x128xf32, #tpu.memory_space<vmem>>, vector<1x1x128xf32>
    tpu.vector_store %arg5[%c0_10, %c0_11, %c0_12], %12 {strides = array<i32>} : memref<1x1x128xf32, #tpu.memory_space<vmem>>, vector<1x1x128xf32>,
    return
  }
  func.func @transform_0(%arg0: i32) -> (i32, i32) {
    %c0_i32 = arith.constant 0 : i32
    %c0_i32_0 = arith.constant 0 : i32
    return %arg0, %c0_i32 : i32, i32
  }
  func.func @transform_1(%arg0: i32) -> (i32, i32) {
    %c0_i32 = arith.constant 0 : i32
    %c0_i32_0 = arith.constant 0 : i32
    %c0_i32_1 = arith.constant 0 : i32
    return %c0_i32, %c0_i32_0 : i32, i32
  }
  func.func @transform_2(%arg0: i32) -> (i32, i32) {
    %c0_i32 = arith.constant 0 : i32
    %c0_i32_0 = arith.constant 0 : i32
    return %arg0, %c0_i32 : i32, i32
  }
  func.func @transform_3(%arg0: i32) -> (i32, i32, i32) {
    %c0_i32 = arith.constant 0 : i32
    %c0_i32_0 = arith.constant 0 : i32
    %c0_i32_1 = arith.constant 0 : i32
    return %arg0, %c0_i32, %c0_i32_0 : i32, i32, i32
  }
  func.func @transform_4(%arg0: i32) -> (i32, i32, i32) {
    %c0_i32 = arith.constant 0 : i32
    %c0_i32_0 = arith.constant 0 : i32
    %c0_i32_1 = arith.constant 0 : i32
    return %arg0, %c0_i32, %c0_i32_0 : i32, i32, i32
  }
}

module attributes {stable_mosaic.version = 11 : i64} {
  func.func @_combine_kernel(%arg0: i32, %arg1: memref<64x128xbf16, #tpu.memory_space<vmem>>, %arg2: memref<1x128xf32, #tpu.memory_space<vmem>>, %arg3: memref<1x128xf32, #tpu.memory_space<vmem>>, %arg4: memref<64x128xbf16, #tpu.memory_space<vmem>>, %arg5: memref<1x128xf32, #tpu.memory_space<vmem>>, %arg6: memref<1x128xf32, #tpu.memory_space<vmem>>, %arg7: memref<64x128xf32, #tpu.memory_space<vmem>>) attributes {dimension_semantics = [#tpu.dimension_semantics<parallel>], iteration_bounds = array<i64: 2>, scalar_prefetch = 0 : i64, scratch_operands = 0 : i64, tpu.core_type = #tpu.core_type<tc>, window_params = [{transform_indices = @transform_0, window_bounds = array<i64: 64, 128>}, {pipeline_mode = #tpu.pipeline_mode<synchronous>, transform_indices = @transform_1, window_bounds = array<i64: 1, 128>}, {pipeline_mode = #tpu.pipeline_mode<synchronous>, transform_indices = @transform_2, window_bounds = array<i64: 1, 128>}, {transform_indices = @transform_3, window_bounds = array<i64: 64, 128>}, {pipeline_mode = #tpu.pipeline_mode<synchronous>, transform_indices = @transform_4, window_bounds = array<i64: 1, 128>}, {pipeline_mode = #tpu.pipeline_mode<synchronous>, transform_indices = @transform_5, window_bounds = array<i64: 1, 128>}, {transform_indices = @transform_6, window_bounds = array<i64: 64, 128>}]} {
    %c0 = arith.constant 0 : index
    %c0_0 = arith.constant 0 : index
    %0 = vector.load %arg1[%c0, %c0_0] : memref<64x128xbf16, #tpu.memory_space<vmem>>, vector<64x128xbf16>
    %1 = arith.extf %0 : vector<64x128xbf16> to vector<64x128xf32>
    %c0_1 = arith.constant 0 : index
    %c0_2 = arith.constant 0 : index
    %2 = vector.load %arg2[%c0_1, %c0_2] : memref<1x128xf32, #tpu.memory_space<vmem>>, vector<1x128xf32>
    %3 = vector.broadcast %2 : vector<1x128xf32> to vector<64x128xf32>
    %4 = arith.mulf %1, %3 : vector<64x128xf32>
    %c0_3 = arith.constant 0 : index
    %c0_4 = arith.constant 0 : index
    %5 = vector.load %arg3[%c0_3, %c0_4] : memref<1x128xf32, #tpu.memory_space<vmem>>, vector<1x128xf32>
    %6 = vector.broadcast %5 : vector<1x128xf32> to vector<64x128xf32>
    %7 = arith.addf %4, %6 : vector<64x128xf32>
    %cst = arith.constant 0.000000e+00 : f32
    %8 = vector.broadcast %cst : f32 to vector<64x128xf32>
    %9 = arith.maximumf %7, %8 : vector<64x128xf32>
    %c0_5 = arith.constant 0 : index
    %c0_6 = arith.constant 0 : index
    %10 = vector.load %arg4[%c0_5, %c0_6] : memref<64x128xbf16, #tpu.memory_space<vmem>>, vector<64x128xbf16>
    %11 = arith.extf %10 : vector<64x128xbf16> to vector<64x128xf32>
    %c0_7 = arith.constant 0 : index
    %c0_8 = arith.constant 0 : index
    %12 = vector.load %arg5[%c0_7, %c0_8] : memref<1x128xf32, #tpu.memory_space<vmem>>, vector<1x128xf32>
    %13 = vector.broadcast %12 : vector<1x128xf32> to vector<64x128xf32>
    %14 = arith.mulf %11, %13 : vector<64x128xf32>
    %c0_9 = arith.constant 0 : index
    %c0_10 = arith.constant 0 : index
    %15 = vector.load %arg6[%c0_9, %c0_10] : memref<1x128xf32, #tpu.memory_space<vmem>>, vector<1x128xf32>
    %16 = vector.broadcast %15 : vector<1x128xf32> to vector<64x128xf32>
    %17 = arith.addf %14, %16 : vector<64x128xf32>
    %cst_11 = arith.constant 0.000000e+00 : f32
    %18 = vector.broadcast %cst_11 : f32 to vector<64x128xf32>
    %19 = arith.maximumf %17, %18 : vector<64x128xf32>
    %20 = vector.extract_strided_slice %9 {offsets = [0, 0], sizes = [64, 8], strides = [1, 1]} : vector<64x128xf32> to vector<64x8xf32>
    %21 = vector.extract_strided_slice %19 {offsets = [0, 0], sizes = [64, 8], strides = [1, 1]} : vector<64x128xf32> to vector<64x8xf32>
    %22 = arith.addf %20, %21 : vector<64x8xf32>
    %23 = vector.extract_strided_slice %19 {offsets = [0, 8], sizes = [64, 8], strides = [1, 1]} : vector<64x128xf32> to vector<64x8xf32>
    %24 = arith.addf %22, %23 : vector<64x8xf32>
    %25 = vector.extract_strided_slice %19 {offsets = [0, 16], sizes = [64, 8], strides = [1, 1]} : vector<64x128xf32> to vector<64x8xf32>
    %26 = arith.addf %24, %25 : vector<64x8xf32>
    %cst_12 = arith.constant 0.000000e+00 : f32
    %27 = vector.broadcast %cst_12 : f32 to vector<64x120xf32>
    %28 = tpu.concatenate %26, %27 in 1 : vector<64x8xf32>, vector<64x120xf32> -> vector<64x128xf32>
    %c0_13 = arith.constant 0 : index
    %c0_14 = arith.constant 0 : index
    %29 = vector.load %arg7[%c0_13, %c0_14] : memref<64x128xf32, #tpu.memory_space<vmem>>, vector<64x128xf32>
    tpu.vector_store %arg7[%c0_13, %c0_14], %28 {strides = array<i32>} : memref<64x128xf32, #tpu.memory_space<vmem>>, vector<64x128xf32>,
    return
  }
  func.func @transform_0(%arg0: i32) -> (i32, i32) {
    %c0_i32 = arith.constant 0 : i32
    %c0_i32_0 = arith.constant 0 : i32
    return %arg0, %c0_i32 : i32, i32
  }
  func.func @transform_1(%arg0: i32) -> (i32, i32) {
    %c0_i32 = arith.constant 0 : i32
    %c0_i32_0 = arith.constant 0 : i32
    %c0_i32_1 = arith.constant 0 : i32
    return %c0_i32, %c0_i32_0 : i32, i32
  }
  func.func @transform_2(%arg0: i32) -> (i32, i32) {
    %c0_i32 = arith.constant 0 : i32
    %c0_i32_0 = arith.constant 0 : i32
    %c0_i32_1 = arith.constant 0 : i32
    return %c0_i32, %c0_i32_0 : i32, i32
  }
  func.func @transform_3(%arg0: i32) -> (i32, i32) {
    %c0_i32 = arith.constant 0 : i32
    %c0_i32_0 = arith.constant 0 : i32
    return %arg0, %c0_i32 : i32, i32
  }
  func.func @transform_4(%arg0: i32) -> (i32, i32) {
    %c0_i32 = arith.constant 0 : i32
    %c0_i32_0 = arith.constant 0 : i32
    %c0_i32_1 = arith.constant 0 : i32
    return %c0_i32, %c0_i32_0 : i32, i32
  }
  func.func @transform_5(%arg0: i32) -> (i32, i32) {
    %c0_i32 = arith.constant 0 : i32
    %c0_i32_0 = arith.constant 0 : i32
    %c0_i32_1 = arith.constant 0 : i32
    return %c0_i32, %c0_i32_0 : i32, i32
  }
  func.func @transform_6(%arg0: i32) -> (i32, i32) {
    %c0_i32 = arith.constant 0 : i32
    %c0_i32_0 = arith.constant 0 : i32
    return %arg0, %c0_i32 : i32, i32
  }
}

</mosaic_0001>

<llo_original>
// kernel: down_c_forward.3
$region0: #{down_c_forward.3}
  #allocation0 [shape = 'u32[]', space=smem, size = 0x4, offset = 0x4, fixed_abs, tag = 'smem constant byte address 0x4 - core index']
  #allocation1 [shape = 'u32[72,128]{1,0:T(1,128)}', space=vmem, size = 0x9000, scoped, tag = 'internal scratch']
  %s0 = inlined_call_operand.vmem [shape: bf16[128,128], index: 0, kind: input, shape index: {}]
  %s1 = inlined_call_operand.vmem [shape: bf16[128,128], index: 1, kind: input, shape index: {}]
  %s2 = inlined_call_operand.vmem [shape: bf16[128,128], index: 2, kind: output, shape index: {0}]
  %s3 = inlined_call_operand.vmem [shape: f32[2,1,128], index: 3, kind: output, shape index: {1}]
  %s4 = inlined_call_operand.vmem [shape: f32[2,1,128], index: 4, kind: output, shape index: {2}]
  %5 = xla_tuple %s2, %s3, %s4
  %s6 = sld [smem:[#allocation0]]
  $region57: #{down_c_forward.3} parent=0
    _
  %s8 = ssub.s32 1, %s6
  %s9 = scalar_select 0, %s8, %s6
  loop: start=0, step=1, limit=4
  $region2: #{down_c_forward.3} parent=0 // loop_pre_header
    _
  $region3: #{down_c_forward.3} parent=0 // loop_header
    %s11 = sphi 0, %s15
    %p12 = scmp.ge.s32.totalorder %s11, 4
    %s21 = sphi 0, %s23
    %s24 = sphi 0, %s21
    %s25 = sphi 0, %s24
    %s41 = sphi 0, %s25
    %s45 = sphi 0, %s45
    %s47 = sphi 0, %s45
    %s48 = sphi 0, %s47
    %s62 = sphi 0, %s48
    %s68 = sphi 0, %s70
    %s71 = sphi 0, %s68
    %s72 = sphi 0, %s71
    %s88 = sphi 0, %s72
    %s94 = sphi 0, %s96
    %s97 = sphi 0, %s94
    %s98 = sphi 0, %s97
    %s114 = sphi 0, %s98
    %s120 = sphi 0, %s122
    %s123 = sphi 0, %s120
    %s124 = sphi 0, %s123
    %s140 = sphi 0, %s124
  $region4: #{down_c_forward.3} parent=0 // loop_header_branch
    %14 = sbr.rel (%p12) target = $region8
  $region5: #{down_c_forward.3} parent=0 // loop_body
    %s16 = ssub.s32 %s11, 1
    %s17 = ssub.s32 %s11, 2
    %s18 = sadd.s32 %s11, 1
    %s19 = ssub.s32 %s11, %s18
    %p20 = scmp.eq.s32.totalorder %s19, 0
    %s22 = sadd.s32 %s21, 1
    %s23 = scalar_select %p20, %s21, %s22
    %p26 = pneg %p20
    %p27 = scmp.eq.s32.totalorder %s11, 1
    %p28 = por %p26, %p27
    %p29 = scmp.ne.s32.totalorder %s21, %s24
    %p30 = scmp.eq.s32.totalorder %s11, 0
    %p31 = por %p29, %p30
    %p32 = scmp.ne.s32.totalorder %s21, %s24
    %p33 = scmp.eq.s32.totalorder %s16, 1
    %p34 = por %p32, %p33
    %p35 = scmp.ne.s32.totalorder %s24, %s25
    %p36 = scmp.eq.s32.totalorder %s16, 0
    %p37 = por %p35, %p36
    %p38 = scmp.ne.s32.totalorder %s24, %s25
    %p39 = scmp.eq.s32.totalorder %s17, 1
    %p40 = por %p38, %p39
    %p42 = scmp.ne.s32.totalorder %s25, %s41
    %p43 = scmp.eq.s32.totalorder %s17, 0
    %p44 = por %p42, %p43
    %s46 = sadd.s32 %s45, 1
    %p49 = scmp.eq.s32.totalorder %s11, 1
    %p50 = scmp.ne.s32.totalorder %s45, %s47
    %p51 = scmp.eq.s32.totalorder %s11, 0
    %p52 = por %p50, %p51
    %p53 = scmp.ne.s32.totalorder %s45, %s47
    %p54 = scmp.eq.s32.totalorder %s16, 1
    %p55 = por %p53, %p54
    %p56 = scmp.ne.s32.totalorder %s47, %s48
    %p57 = scmp.eq.s32.totalorder %s16, 0
    %p58 = por %p56, %p57
    %p59 = scmp.ne.s32.totalorder %s47, %s48
    %p60 = scmp.eq.s32.totalorder %s17, 1
    %p61 = por %p59, %p60
    %p63 = scmp.ne.s32.totalorder %s48, %s62
    %p64 = scmp.eq.s32.totalorder %s17, 0
    %p65 = por %p63, %p64
    %s66 = ssub.s32 %s11, %s18
    %p67 = scmp.eq.s32.totalorder %s66, 0
    %s69 = sadd.s32 %s68, 1
    %s70 = scalar_select %p67, %s68, %s69
    %p73 = pneg %p67
    %p74 = scmp.eq.s32.totalorder %s11, 1
    %p75 = por %p73, %p74
    %p76 = scmp.ne.s32.totalorder %s68, %s71
    %p77 = scmp.eq.s32.totalorder %s11, 0
    %p78 = por %p76, %p77
    %p79 = scmp.ne.s32.totalorder %s68, %s71
    %p80 = scmp.eq.s32.totalorder %s16, 1
    %p81 = por %p79, %p80
    %p82 = scmp.ne.s32.totalorder %s71, %s72
    %p83 = scmp.eq.s32.totalorder %s16, 0
    %p84 = por %p82, %p83
    %p85 = scmp.ne.s32.totalorder %s71, %s72
    %p86 = scmp.eq.s32.totalorder %s17, 1
    %p87 = por %p85, %p86
    %p89 = scmp.ne.s32.totalorder %s72, %s88
    %p90 = scmp.eq.s32.totalorder %s17, 0
    %p91 = por %p89, %p90
    %s92 = ssub.s32 %s11, %s18
    %p93 = scmp.eq.s32.totalorder %s92, 0
    %s95 = sadd.s32 %s94, 1
    %s96 = scalar_select %p93, %s94, %s95
    %p99 = pneg %p93
    %p100 = scmp.eq.s32.totalorder %s11, 1
    %p101 = por %p99, %p100
    %p102 = scmp.ne.s32.totalorder %s94, %s97
    %p103 = scmp.eq.s32.totalorder %s11, 0
    %p104 = por %p102, %p103
    %p105 = scmp.ne.s32.totalorder %s94, %s97
    %p106 = scmp.eq.s32.totalorder %s16, 1
    %p107 = por %p105, %p106
    %p108 = scmp.ne.s32.totalorder %s97, %s98
    %p109 = scmp.eq.s32.totalorder %s16, 0
    %p110 = por %p108, %p109
    %p111 = scmp.ne.s32.totalorder %s97, %s98
    %p112 = scmp.eq.s32.totalorder %s17, 1
    %p113 = por %p111, %p112
    %p115 = scmp.ne.s32.totalorder %s98, %s114
    %p116 = scmp.eq.s32.totalorder %s17, 0
    %p117 = por %p115, %p116
    %s118 = ssub.s32 %s11, %s18
    %p119 = scmp.eq.s32.totalorder %s118, 0
    %s121 = sadd.s32 %s120, 1
    %s122 = scalar_select %p119, %s120, %s121
    %p125 = pneg %p119
    %p126 = scmp.eq.s32.totalorder %s11, 1
    %p127 = por %p125, %p126
    %p128 = scmp.ne.s32.totalorder %s120, %s123
    %p129 = scmp.eq.s32.totalorder %s11, 0
    %p130 = por %p128, %p129
    %p131 = scmp.ne.s32.totalorder %s120, %s123
    %p132 = scmp.eq.s32.totalorder %s16, 1
    %p133 = por %p131, %p132
    %p134 = scmp.ne.s32.totalorder %s123, %s124
    %p135 = scmp.eq.s32.totalorder %s16, 0
    %p136 = por %p134, %p135
    %p137 = scmp.ne.s32.totalorder %s123, %s124
    %p138 = scmp.eq.s32.totalorder %s17, 1
    %p139 = por %p137, %p138
    %p141 = scmp.ne.s32.totalorder %s124, %s140
    %p142 = scmp.eq.s32.totalorder %s17, 0
    %p143 = por %p141, %p142
    %p144 = scmp.le.s32.totalorder 1, %s11
    %p145 = scmp.lt.s32.totalorder %s11, 3
    %p146 = pnand %p144, %p145
    %p147 = pneg %p146
    // Predicated region
    $region9: #{down_c_forward.3} parent=5 // pred_check
      _
    $region10: #{down_c_forward.3} parent=5 // pred_check_branch
      %149 = sbr.rel (%p146) target = $region12
    $region11: #{down_c_forward.3} parent=5 // pred_region
      %s150 = ssub.s32 %s11, 1
      // Predicated region
      $region13: #{down_c_forward.3} parent=11 // pred_check
        %p151 = pneg %p58
      $region14: #{down_c_forward.3} parent=11 // pred_check_branch
        %153 = sbr.rel (%p151) target = $region16
      $region15: #{down_c_forward.3} parent=11 // pred_region
        _
      $region16: #{down_c_forward.3} parent=11 // pred_fallthru
        _
    $region12: #{down_c_forward.3} parent=5 // pred_fallthru
      _
    %p154 = scmp.lt.s32.totalorder %s11, 2
    // Predicated region
    $region17: #{down_c_forward.3} parent=5 // pred_check
      %p155 = pneg %p154
    $region18: #{down_c_forward.3} parent=5 // pred_check_branch
      %157 = sbr.rel (%p155) target = $region20
    $region19: #{down_c_forward.3} parent=5 // pred_region
      // Predicated region
      $region21: #{down_c_forward.3} parent=19 // pred_check
        %p158 = pneg %p31
      $region22: #{down_c_forward.3} parent=19 // pred_check_branch
        %160 = sbr.rel (%p158) target = $region24
      $region23: #{down_c_forward.3} parent=19 // pred_region
        %s161 = smul.u32 8, %s11
        %p162 = scmp.lt.s32.totalorder %s161, 15
        %s163 = scalar_select %p162, %s161, 15
        %s164 = smul.addr %s163, 4
        %s165 = scalar_lea.vmem %s0, %s164
        %s166 = smul.u32 8, %s11
      $region24: #{down_c_forward.3} parent=19 // pred_fallthru
        _
    $region20: #{down_c_forward.3} parent=5 // pred_fallthru
      _
    %p167 = scmp.le.s32.totalorder 1, %s11
    %p168 = scmp.lt.s32.totalorder %s11, 3
    %p169 = pnand %p167, %p168
    %p170 = pneg %p169
    // Predicated region
    $region25: #{down_c_forward.3} parent=5 // pred_check
      _
    $region26: #{down_c_forward.3} parent=5 // pred_check_branch
      %172 = sbr.rel (%p169) target = $region28
    $region27: #{down_c_forward.3} parent=5 // pred_region
      %s173 = ssub.s32 %s11, 1
      %s174 = smul.u32 8, %s16
      %p175 = scmp.lt.s32.totalorder %s174, 15
      %s176 = scalar_select %p175, %s174, 15
      %s177 = smul.addr %s176, 4
      %s178 = scalar_lea.vmem %s0, %s177
      %p179 = pneg %p37
      %p180 = pneg %p34
      %p181 = pneg %p58
      %p182 = pneg %p55
      %p183 = pneg %p84
      %p184 = pneg %p81
      %s185 = smul.u32 8, %s16
      %p186 = scmp.lt.s32.totalorder %s185, 15
      %s187 = scalar_select %p186, %s185, 15
      %s188 = smul.addr %s187, 4
      %s189 = scalar_lea.vmem %s2, %s188
      %p190 = pneg %p110
      %p191 = pneg %p107
      %p192 = scmp.lt.s32.totalorder %s16, 1
      %s193 = scalar_select %p192, %s16, 1
      %s194 = scalar_lea.vmem %s3, %s193
      %p195 = pneg %p136
      %p196 = pneg %p133
      %p197 = scmp.lt.s32.totalorder %s16, 1
      %s198 = scalar_select %p197, %s16, 1
      %s199 = scalar_lea.vmem %s4, %s198
      %s200 = smul.u32 8, %s16
      %p201 = scmp.lt.s32.totalorder %s200, 15
      %s202 = scalar_select %p201, %s200, 15
      %s203 = smul.addr %s202, 4
      %s204 = scalar_lea.vmem %s0, %s203
      %s205 = smul.u32 8, %s16
      %s206 = smul.u32 8, %s16
      %p207 = scmp.lt.s32.totalorder %s206, 15
      %s208 = scalar_select %p207, %s206, 15
      %s209 = smul.addr %s208, 4
      %s210 = scalar_lea.vmem %s2, %s209
      %s211 = smul.u32 8, %s16
      %p212 = scmp.lt.s32.totalorder %s16, 1
      %s213 = scalar_select %p212, %s16, 1
      %s214 = scalar_lea.vmem %s3, %s213
      %p215 = scmp.lt.s32.totalorder %s16, 1
      %s216 = scalar_select %p215, %s16, 1
      %s217 = scalar_lea.vmem %s4, %s216
      %v218 = vld [vmem:[%s204] sm:$0xf]
      %v219 = vld [vmem:[%s204 + $0x4] sm:$0xf]
      %v220 = vld [vmem:[%s204 + $0x8] sm:$0xf]
      %v221 = vld [vmem:[%s204 + $0xc] sm:$0xf]
      %v222 = vld [vmem:[%s204 + $0x10] sm:$0xf]
      %v223 = vld [vmem:[%s204 + $0x14] sm:$0xf]
      %v224 = vld [vmem:[%s204 + $0x18] sm:$0xf]
      %v225 = vld [vmem:[%s204 + $0x1c] sm:$0xf]
      %v226 = vld [vmem:[%s1] sm:$0xf]
      %v227 = vld [vmem:[%s1 + $0x4] sm:$0xf]
      %v228 = vld [vmem:[%s1 + $0x8] sm:$0xf]
      %v229 = vld [vmem:[%s1 + $0xc] sm:$0xf]
      %v230 = vld [vmem:[%s1 + $0x10] sm:$0xf]
      %v231 = vld [vmem:[%s1 + $0x14] sm:$0xf]
      %v232 = vld [vmem:[%s1 + $0x18] sm:$0xf]
      %v233 = vld [vmem:[%s1 + $0x1c] sm:$0xf]
      %v234 = vld [vmem:[%s1 + $0x20] sm:$0xf]
      %v235 = vld [vmem:[%s1 + $0x24] sm:$0xf]
      %v236 = vld [vmem:[%s1 + $0x28] sm:$0xf]
      %v237 = vld [vmem:[%s1 + $0x2c] sm:$0xf]
      %v238 = vld [vmem:[%s1 + $0x30] sm:$0xf]
      %v239 = vld [vmem:[%s1 + $0x34] sm:$0xf]
      %v240 = vld [vmem:[%s1 + $0x38] sm:$0xf]
      %v241 = vld [vmem:[%s1 + $0x3c] sm:$0xf]
      %v250 = vunpack.c.l.b16 %v218
      %v251 = vunpack.c.l.b16 %v219
      %v252 = vunpack.c.l.b16 %v220
      %v253 = vunpack.c.l.b16 %v221
      %v254 = vunpack.c.l.b16 %v222
      %v255 = vunpack.c.l.b16 %v223
      %v256 = vunpack.c.l.b16 %v224
      %v257 = vunpack.c.l.b16 %v225
      %v258 = vpack.c.b16 %v251, %v250
      %v259 = vpack.c.b16 %v253, %v252
      %v260 = vpack.c.b16 %v255, %v254
      %v261 = vpack.c.b16 %v257, %v256
      %v282 = vunpack.c.l.b16 %v226
      %v283 = vunpack.c.l.b16 %v227
      %v284 = vunpack.c.l.b16 %v228
      %v285 = vunpack.c.l.b16 %v229
      %v286 = vunpack.c.l.b16 %v230
      %v287 = vunpack.c.l.b16 %v231
      %v288 = vunpack.c.l.b16 %v232
      %v289 = vunpack.c.l.b16 %v233
      %v290 = vunpack.c.l.b16 %v234
      %v291 = vunpack.c.l.b16 %v235
      %v292 = vunpack.c.l.b16 %v236
      %v293 = vunpack.c.l.b16 %v237
      %v294 = vunpack.c.l.b16 %v238
      %v295 = vunpack.c.l.b16 %v239
      %v296 = vunpack.c.l.b16 %v240
      %v297 = vunpack.c.l.b16 %v241
      %v298 = vpack.c.b16 %v283, %v282
      %v299 = vpack.c.b16 %v285, %v284
      %v300 = vpack.c.b16 %v287, %v286
      %v301 = vpack.c.b16 %v289, %v288
      %v302 = vpack.c.b16 %v291, %v290
      %v303 = vpack.c.b16 %v293, %v292
      %v304 = vpack.c.b16 %v295, %v294
      %v305 = vpack.c.b16 %v297, %v296
      %314 = vmatpush.bf16.msra.mxu0 %v305
      %315 = vmatpush.bf16.msra.mxu0 %v304
      %316 = vmatpush.bf16.msra.mxu0 %v303
      %317 = vmatpush.bf16.msra.mxu0 %v302
      %318 = vmatpush.bf16.msra.mxu0 %v301
      %319 = vmatpush.bf16.msra.mxu0 %v300
      %320 = vmatpush.bf16.msra.mxu0 %v299
      %321 = vmatpush.bf16.msra.mxu0 %v298
      %322 = vmatmul.bf16.gmra.mxu0 %v258
      %v323 = vpop.f32.mrf.mxu0
      %v324 = vadd.f32 0.0, %v323
      %v325 = vpop.f32.mrf.mxu0
      %v326 = vadd.f32 0.0, %v325
      %327 = vmatmul.bf16.gmra.mxu0 %v259
      %v328 = vpop.f32.mrf.mxu0
      %v329 = vadd.f32 0.0, %v328
      %v330 = vpop.f32.mrf.mxu0
      %v331 = vadd.f32 0.0, %v330
      %332 = vmatmul.bf16.gmra.mxu0 %v260
      %v333 = vpop.f32.mrf.mxu0
      %v334 = vadd.f32 0.0, %v333
      %v335 = vpop.f32.mrf.mxu0
      %v336 = vadd.f32 0.0, %v335
      %337 = vmatmul.bf16.gmra.mxu0 %v261
      %v338 = vpop.f32.mrf.mxu0
      %v339 = vadd.f32 0.0, %v338
      %v340 = vpop.f32.mrf.mxu0
      %v341 = vadd.f32 0.0, %v340
      %342 = vdwg.mxu0
      %v343 = vpack.c.bf16 %v324, %v324
      %v344 = vpack.c.bf16 %v326, %v326
      %v345 = vpack.c.bf16 %v329, %v329
      %v346 = vpack.c.bf16 %v331, %v331
      %v347 = vpack.c.bf16 %v334, %v334
      %v348 = vpack.c.bf16 %v336, %v336
      %v349 = vpack.c.bf16 %v339, %v339
      %v350 = vpack.c.bf16 %v341, %v341
      %351 = vst [vmem:[%s210] sm:$0xf] %v343
      %352 = vst [vmem:[%s210 + $0x4] sm:$0xf] %v344
      %353 = vst [vmem:[%s210 + $0x8] sm:$0xf] %v345
      %354 = vst [vmem:[%s210 + $0xc] sm:$0xf] %v346
      %355 = vst [vmem:[%s210 + $0x10] sm:$0xf] %v347
      %356 = vst [vmem:[%s210 + $0x14] sm:$0xf] %v348
      %357 = vst [vmem:[%s210 + $0x18] sm:$0xf] %v349
      %358 = vst [vmem:[%s210 + $0x1c] sm:$0xf] %v350
      %v359 = vadd.f32 %v324, %v326
      %v360 = vadd.f32 %v359, %v329
      %v361 = vadd.f32 %v360, %v331
      %v362 = vadd.f32 %v361, %v334
      %v363 = vadd.f32 %v362, %v336
      %v364 = vadd.f32 %v363, %v339
      %v365 = vadd.f32 %v364, %v341
      %v366 = vrot.slane %v365, 4
      %v367 = vadd.f32 %v365, %v366
      %v368 = vrot.slane %v367, 2
      %v369 = vadd.f32 %v367, %v368
      %v370 = vrot.slane %v369, 1
      %v371 = vadd.f32 %v369, %v370
      %372 = vst [vmem:[%s214] sm:$0x1] %v371
      %v373 = vmul.f32 %v324, %v324
      %v374 = vmul.f32 %v326, %v326
      %v375 = vmul.f32 %v329, %v329
      %v376 = vmul.f32 %v331, %v331
      %v377 = vmul.f32 %v334, %v334
      %v378 = vmul.f32 %v336, %v336
      %v379 = vmul.f32 %v339, %v339
      %v380 = vmul.f32 %v341, %v341
      %v381 = vadd.f32 %v373, %v374
      %v382 = vadd.f32 %v381, %v375
      %v383 = vadd.f32 %v382, %v376
      %v384 = vadd.f32 %v383, %v377
      %v385 = vadd.f32 %v384, %v378
      %v386 = vadd.f32 %v385, %v379
      %v387 = vadd.f32 %v386, %v380
      %v388 = vrot.slane %v387, 4
      %v389 = vadd.f32 %v387, %v388
      %v390 = vrot.slane %v389, 2
      %v391 = vadd.f32 %v389, %v390
      %v392 = vrot.slane %v391, 1
      %v393 = vadd.f32 %v391, %v392
      %394 = vst [vmem:[%s217] sm:$0x1] %v393
      %s395 = smul.u32 8, %s16
      %p396 = scmp.lt.s32.totalorder %s395, 15
      %s397 = scalar_select %p396, %s395, 15
      %s398 = smul.addr %s397, 4
      %s399 = scalar_lea.vmem %s2, %s398
      %p400 = scmp.lt.s32.totalorder %s16, 1
      %s401 = scalar_select %p400, %s16, 1
      %s402 = scalar_lea.vmem %s3, %s401
      %p403 = scmp.lt.s32.totalorder %s16, 1
      %s404 = scalar_select %p403, %s16, 1
      %s405 = scalar_lea.vmem %s4, %s404
      // Predicated region
      $region29: #{down_c_forward.3} parent=27 // pred_check
        %p406 = pneg %p81
      $region30: #{down_c_forward.3} parent=27 // pred_check_branch
        %408 = sbr.rel (%p406) target = $region32
      $region31: #{down_c_forward.3} parent=27 // pred_region
        %s409 = smul.u32 8, %s16
      $region32: #{down_c_forward.3} parent=27 // pred_fallthru
        _
      // Predicated region
      $region33: #{down_c_forward.3} parent=27 // pred_check
        %p410 = pneg %p107
      $region34: #{down_c_forward.3} parent=27 // pred_check_branch
        %412 = sbr.rel (%p410) target = $region36
      $region35: #{down_c_forward.3} parent=27 // pred_region
        _
      $region36: #{down_c_forward.3} parent=27 // pred_fallthru
        _
      // Predicated region
      $region37: #{down_c_forward.3} parent=27 // pred_check
        %p413 = pneg %p133
      $region38: #{down_c_forward.3} parent=27 // pred_check_branch
        %415 = sbr.rel (%p413) target = $region40
      $region39: #{down_c_forward.3} parent=27 // pred_region
        _
      $region40: #{down_c_forward.3} parent=27 // pred_fallthru
        _
    $region28: #{down_c_forward.3} parent=5 // pred_fallthru
      _
    %p416 = scmp.le.s32.totalorder 2, %s11
    // Predicated region
    $region41: #{down_c_forward.3} parent=5 // pred_check
      %p417 = pneg %p416
    $region42: #{down_c_forward.3} parent=5 // pred_check_branch
      %419 = sbr.rel (%p417) target = $region44
    $region43: #{down_c_forward.3} parent=5 // pred_region
      %s420 = ssub.s32 %s11, 2
      // Predicated region
      $region45: #{down_c_forward.3} parent=43 // pred_check
        %p421 = pneg %p87
      $region46: #{down_c_forward.3} parent=43 // pred_check_branch
        %423 = sbr.rel (%p421) target = $region48
      $region47: #{down_c_forward.3} parent=43 // pred_region
        %s424 = smul.u32 8, %s17
        %p425 = scmp.lt.s32.totalorder %s424, 15
        %s426 = scalar_select %p425, %s424, 15
        %s427 = smul.addr %s426, 4
        %s428 = scalar_lea.vmem %s2, %s427
      $region48: #{down_c_forward.3} parent=43 // pred_fallthru
        _
      // Predicated region
      $region49: #{down_c_forward.3} parent=43 // pred_check
        %p429 = pneg %p113
      $region50: #{down_c_forward.3} parent=43 // pred_check_branch
        %431 = sbr.rel (%p429) target = $region52
      $region51: #{down_c_forward.3} parent=43 // pred_region
        %p432 = scmp.lt.s32.totalorder %s17, 1
        %s433 = scalar_select %p432, %s17, 1
        %s434 = scalar_lea.vmem %s3, %s433
      $region52: #{down_c_forward.3} parent=43 // pred_fallthru
        _
      // Predicated region
      $region53: #{down_c_forward.3} parent=43 // pred_check
        %p435 = pneg %p139
      $region54: #{down_c_forward.3} parent=43 // pred_check_branch
        %437 = sbr.rel (%p435) target = $region56
      $region55: #{down_c_forward.3} parent=43 // pred_region
        %p438 = scmp.lt.s32.totalorder %s17, 1
        %s439 = scalar_select %p438, %s17, 1
        %s440 = scalar_lea.vmem %s4, %s439
      $region56: #{down_c_forward.3} parent=43 // pred_fallthru
        _
    $region44: #{down_c_forward.3} parent=5 // pred_fallthru
      _
  $region6: #{down_c_forward.3} parent=0 // loop_footer
    %s15 = sadd.s32 1, %s11
  $region7: #{down_c_forward.3} parent=0 // loop_footer_branch
    %10 = sbr.rel target = $region3
  $region8: #{down_c_forward.3} parent=0 // loop_exit
    _

// kernel: down_c_forward.4
$region0: #{down_c_forward.4}
  #allocation0 [shape = 'u32[]', space=smem, size = 0x4, offset = 0x4, fixed_abs, tag = 'smem constant byte address 0x4 - core index']
  #allocation1 [shape = 'u32[72,128]{1,0:T(1,128)}', space=vmem, size = 0x9000, scoped, tag = 'internal scratch']
  %s0 = inlined_call_operand.vmem [shape: bf16[128,512], index: 0, kind: input, shape index: {}]
  %s1 = inlined_call_operand.vmem [shape: bf16[512,128], index: 1, kind: input, shape index: {}]
  %s2 = inlined_call_operand.vmem [shape: bf16[128,128], index: 2, kind: output, shape index: {0}]
  %s3 = inlined_call_operand.vmem [shape: f32[2,1,128], index: 3, kind: output, shape index: {1}]
  %s4 = inlined_call_operand.vmem [shape: f32[2,1,128], index: 4, kind: output, shape index: {2}]
  %5 = xla_tuple %s2, %s3, %s4
  %s6 = sld [smem:[#allocation0]]
  $region57: #{down_c_forward.4} parent=0
    _
  %s8 = ssub.s32 1, %s6
  %s9 = scalar_select 0, %s8, %s6
  loop: start=0, step=1, limit=4
  $region2: #{down_c_forward.4} parent=0 // loop_pre_header
    _
  $region3: #{down_c_forward.4} parent=0 // loop_header
    %s11 = sphi 0, %s15
    %p12 = scmp.ge.s32.totalorder %s11, 4
    %s21 = sphi 0, %s23
    %s24 = sphi 0, %s21
    %s25 = sphi 0, %s24
    %s41 = sphi 0, %s25
    %s45 = sphi 0, %s45
    %s47 = sphi 0, %s45
    %s48 = sphi 0, %s47
    %s62 = sphi 0, %s48
    %s68 = sphi 0, %s70
    %s71 = sphi 0, %s68
    %s72 = sphi 0, %s71
    %s88 = sphi 0, %s72
    %s94 = sphi 0, %s96
    %s97 = sphi 0, %s94
    %s98 = sphi 0, %s97
    %s114 = sphi 0, %s98
    %s120 = sphi 0, %s122
    %s123 = sphi 0, %s120
    %s124 = sphi 0, %s123
    %s140 = sphi 0, %s124
  $region4: #{down_c_forward.4} parent=0 // loop_header_branch
    %14 = sbr.rel (%p12) target = $region8
  $region5: #{down_c_forward.4} parent=0 // loop_body
    %s16 = ssub.s32 %s11, 1
    %s17 = ssub.s32 %s11, 2
    %s18 = sadd.s32 %s11, 1
    %s19 = ssub.s32 %s11, %s18
    %p20 = scmp.eq.s32.totalorder %s19, 0
    %s22 = sadd.s32 %s21, 1
    %s23 = scalar_select %p20, %s21, %s22
    %p26 = pneg %p20
    %p27 = scmp.eq.s32.totalorder %s11, 1
    %p28 = por %p26, %p27
    %p29 = scmp.ne.s32.totalorder %s21, %s24
    %p30 = scmp.eq.s32.totalorder %s11, 0
    %p31 = por %p29, %p30
    %p32 = scmp.ne.s32.totalorder %s21, %s24
    %p33 = scmp.eq.s32.totalorder %s16, 1
    %p34 = por %p32, %p33
    %p35 = scmp.ne.s32.totalorder %s24, %s25
    %p36 = scmp.eq.s32.totalorder %s16, 0
    %p37 = por %p35, %p36
    %p38 = scmp.ne.s32.totalorder %s24, %s25
    %p39 = scmp.eq.s32.totalorder %s17, 1
    %p40 = por %p38, %p39
    %p42 = scmp.ne.s32.totalorder %s25, %s41
    %p43 = scmp.eq.s32.totalorder %s17, 0
    %p44 = por %p42, %p43
    %s46 = sadd.s32 %s45, 1
    %p49 = scmp.eq.s32.totalorder %s11, 1
    %p50 = scmp.ne.s32.totalorder %s45, %s47
    %p51 = scmp.eq.s32.totalorder %s11, 0
    %p52 = por %p50, %p51
    %p53 = scmp.ne.s32.totalorder %s45, %s47
    %p54 = scmp.eq.s32.totalorder %s16, 1
    %p55 = por %p53, %p54
    %p56 = scmp.ne.s32.totalorder %s47, %s48
    %p57 = scmp.eq.s32.totalorder %s16, 0
    %p58 = por %p56, %p57
    %p59 = scmp.ne.s32.totalorder %s47, %s48
    %p60 = scmp.eq.s32.totalorder %s17, 1
    %p61 = por %p59, %p60
    %p63 = scmp.ne.s32.totalorder %s48, %s62
    %p64 = scmp.eq.s32.totalorder %s17, 0
    %p65 = por %p63, %p64
    %s66 = ssub.s32 %s11, %s18
    %p67 = scmp.eq.s32.totalorder %s66, 0
    %s69 = sadd.s32 %s68, 1
    %s70 = scalar_select %p67, %s68, %s69
    %p73 = pneg %p67
    %p74 = scmp.eq.s32.totalorder %s11, 1
    %p75 = por %p73, %p74
    %p76 = scmp.ne.s32.totalorder %s68, %s71
    %p77 = scmp.eq.s32.totalorder %s11, 0
    %p78 = por %p76, %p77
    %p79 = scmp.ne.s32.totalorder %s68, %s71
    %p80 = scmp.eq.s32.totalorder %s16, 1
    %p81 = por %p79, %p80
    %p82 = scmp.ne.s32.totalorder %s71, %s72
    %p83 = scmp.eq.s32.totalorder %s16, 0
    %p84 = por %p82, %p83
    %p85 = scmp.ne.s32.totalorder %s71, %s72
    %p86 = scmp.eq.s32.totalorder %s17, 1
    %p87 = por %p85, %p86
    %p89 = scmp.ne.s32.totalorder %s72, %s88
    %p90 = scmp.eq.s32.totalorder %s17, 0
    %p91 = por %p89, %p90
    %s92 = ssub.s32 %s11, %s18
    %p93 = scmp.eq.s32.totalorder %s92, 0
    %s95 = sadd.s32 %s94, 1
    %s96 = scalar_select %p93, %s94, %s95
    %p99 = pneg %p93
    %p100 = scmp.eq.s32.totalorder %s11, 1
    %p101 = por %p99, %p100
    %p102 = scmp.ne.s32.totalorder %s94, %s97
    %p103 = scmp.eq.s32.totalorder %s11, 0
    %p104 = por %p102, %p103
    %p105 = scmp.ne.s32.totalorder %s94, %s97
    %p106 = scmp.eq.s32.totalorder %s16, 1
    %p107 = por %p105, %p106
    %p108 = scmp.ne.s32.totalorder %s97, %s98
    %p109 = scmp.eq.s32.totalorder %s16, 0
    %p110 = por %p108, %p109
    %p111 = scmp.ne.s32.totalorder %s97, %s98
    %p112 = scmp.eq.s32.totalorder %s17, 1
    %p113 = por %p111, %p112
    %p115 = scmp.ne.s32.totalorder %s98, %s114
    %p116 = scmp.eq.s32.totalorder %s17, 0
    %p117 = por %p115, %p116
    %s118 = ssub.s32 %s11, %s18
    %p119 = scmp.eq.s32.totalorder %s118, 0
    %s121 = sadd.s32 %s120, 1
    %s122 = scalar_select %p119, %s120, %s121
    %p125 = pneg %p119
    %p126 = scmp.eq.s32.totalorder %s11, 1
    %p127 = por %p125, %p126
    %p128 = scmp.ne.s32.totalorder %s120, %s123
    %p129 = scmp.eq.s32.totalorder %s11, 0
    %p130 = por %p128, %p129
    %p131 = scmp.ne.s32.totalorder %s120, %s123
    %p132 = scmp.eq.s32.totalorder %s16, 1
    %p133 = por %p131, %p132
    %p134 = scmp.ne.s32.totalorder %s123, %s124
    %p135 = scmp.eq.s32.totalorder %s16, 0
    %p136 = por %p134, %p135
    %p137 = scmp.ne.s32.totalorder %s123, %s124
    %p138 = scmp.eq.s32.totalorder %s17, 1
    %p139 = por %p137, %p138
    %p141 = scmp.ne.s32.totalorder %s124, %s140
    %p142 = scmp.eq.s32.totalorder %s17, 0
    %p143 = por %p141, %p142
    %p144 = scmp.le.s32.totalorder 1, %s11
    %p145 = scmp.lt.s32.totalorder %s11, 3
    %p146 = pnand %p144, %p145
    %p147 = pneg %p146
    // Predicated region
    $region9: #{down_c_forward.4} parent=5 // pred_check
      _
    $region10: #{down_c_forward.4} parent=5 // pred_check_branch
      %149 = sbr.rel (%p146) target = $region12
    $region11: #{down_c_forward.4} parent=5 // pred_region
      %s150 = ssub.s32 %s11, 1
      // Predicated region
      $region13: #{down_c_forward.4} parent=11 // pred_check
        %p151 = pneg %p58
      $region14: #{down_c_forward.4} parent=11 // pred_check_branch
        %153 = sbr.rel (%p151) target = $region16
      $region15: #{down_c_forward.4} parent=11 // pred_region
        _
      $region16: #{down_c_forward.4} parent=11 // pred_fallthru
        _
    $region12: #{down_c_forward.4} parent=5 // pred_fallthru
      _
    %p154 = scmp.lt.s32.totalorder %s11, 2
    // Predicated region
    $region17: #{down_c_forward.4} parent=5 // pred_check
      %p155 = pneg %p154
    $region18: #{down_c_forward.4} parent=5 // pred_check_branch
      %157 = sbr.rel (%p155) target = $region20
    $region19: #{down_c_forward.4} parent=5 // pred_region
      // Predicated region
      $region21: #{down_c_forward.4} parent=19 // pred_check
        %p158 = pneg %p31
      $region22: #{down_c_forward.4} parent=19 // pred_check_branch
        %160 = sbr.rel (%p158) target = $region24
      $region23: #{down_c_forward.4} parent=19 // pred_region
        %s161 = smul.u32 8, %s11
        %p162 = scmp.lt.s32.totalorder %s161, 15
        %s163 = scalar_select %p162, %s161, 15
        %s164 = smul.addr %s163, 4
        %s165 = smul.addr %s164, 4
        %s166 = scalar_lea.vmem %s0, %s165
        %s167 = smul.u32 8, %s11
      $region24: #{down_c_forward.4} parent=19 // pred_fallthru
        _
    $region20: #{down_c_forward.4} parent=5 // pred_fallthru
      _
    %p168 = scmp.le.s32.totalorder 1, %s11
    %p169 = scmp.lt.s32.totalorder %s11, 3
    %p170 = pnand %p168, %p169
    %p171 = pneg %p170
    // Predicated region
    $region25: #{down_c_forward.4} parent=5 // pred_check
      _
    $region26: #{down_c_forward.4} parent=5 // pred_check_branch
      %173 = sbr.rel (%p170) target = $region28
    $region27: #{down_c_forward.4} parent=5 // pred_region
      %s174 = ssub.s32 %s11, 1
      %s175 = smul.u32 8, %s16
      %p176 = scmp.lt.s32.totalorder %s175, 15
      %s177 = scalar_select %p176, %s175, 15
      %s178 = smul.addr %s177, 4
      %s179 = smul.addr %s178, 4
      %s180 = scalar_lea.vmem %s0, %s179
      %p181 = pneg %p37
      %p182 = pneg %p34
      %p183 = pneg %p58
      %p184 = pneg %p55
      %p185 = pneg %p84
      %p186 = pneg %p81
      %s187 = smul.u32 8, %s16
      %p188 = scmp.lt.s32.totalorder %s187, 15
      %s189 = scalar_select %p188, %s187, 15
      %s190 = smul.addr %s189, 4
      %s191 = scalar_lea.vmem %s2, %s190
      %p192 = pneg %p110
      %p193 = pneg %p107
      %p194 = scmp.lt.s32.totalorder %s16, 1
      %s195 = scalar_select %p194, %s16, 1
      %s196 = scalar_lea.vmem %s3, %s195
      %p197 = pneg %p136
      %p198 = pneg %p133
      %p199 = scmp.lt.s32.totalorder %s16, 1
      %s200 = scalar_select %p199, %s16, 1
      %s201 = scalar_lea.vmem %s4, %s200
      %s202 = smul.u32 8, %s16
      %p203 = scmp.lt.s32.totalorder %s202, 15
      %s204 = scalar_select %p203, %s202, 15
      %s205 = smul.addr %s204, 4
      %s206 = smul.addr %s205, 4
      %s207 = scalar_lea.vmem %s0, %s206
      %s208 = smul.u32 8, %s16
      %s209 = smul.u32 8, %s16
      %p210 = scmp.lt.s32.totalorder %s209, 15
      %s211 = scalar_select %p210, %s209, 15
      %s212 = smul.addr %s211, 4
      %s213 = scalar_lea.vmem %s2, %s212
      %s214 = smul.u32 8, %s16
      %p215 = scmp.lt.s32.totalorder %s16, 1
      %s216 = scalar_select %p215, %s16, 1
      %s217 = scalar_lea.vmem %s3, %s216
      %p218 = scmp.lt.s32.totalorder %s16, 1
      %s219 = scalar_select %p218, %s16, 1
      %s220 = scalar_lea.vmem %s4, %s219
      %v221 = vld [vmem:[%s207] sm:$0xff]
      %v222 = vld [vmem:[%s207 + $0x8] sm:$0xff]
      %v223 = vld [vmem:[%s207 + $0x10] sm:$0xff]
      %v224 = vld [vmem:[%s207 + $0x18] sm:$0xff]
      %v225 = vld [vmem:[%s207 + $0x20] sm:$0xff]
      %v226 = vld [vmem:[%s207 + $0x28] sm:$0xff]
      %v227 = vld [vmem:[%s207 + $0x30] sm:$0xff]
      %v228 = vld [vmem:[%s207 + $0x38] sm:$0xff]
      %v229 = vld [vmem:[%s207 + $0x40] sm:$0xff]
      %v230 = vld [vmem:[%s207 + $0x48] sm:$0xff]
      %v231 = vld [vmem:[%s207 + $0x50] sm:$0xff]
      %v232 = vld [vmem:[%s207 + $0x58] sm:$0xff]
      %v233 = vld [vmem:[%s207 + $0x60] sm:$0xff]
      %v234 = vld [vmem:[%s207 + $0x68] sm:$0xff]
      %v235 = vld [vmem:[%s207 + $0x70] sm:$0xff]
      %v236 = vld [vmem:[%s207 + $0x78] sm:$0xff]
      %v237 = vld [vmem:[%s1] sm:$0xf]
      %v238 = vld [vmem:[%s1 + $0x4] sm:$0xf]
      %v239 = vld [vmem:[%s1 + $0x8] sm:$0xf]
      %v240 = vld [vmem:[%s1 + $0xc] sm:$0xf]
      %v241 = vld [vmem:[%s1 + $0x10] sm:$0xf]
      %v242 = vld [vmem:[%s1 + $0x14] sm:$0xf]
      %v243 = vld [vmem:[%s1 + $0x18] sm:$0xf]
      %v244 = vld [vmem:[%s1 + $0x1c] sm:$0xf]
      %v245 = vld [vmem:[%s1 + $0x20] sm:$0xf]
      %v246 = vld [vmem:[%s1 + $0x24] sm:$0xf]
      %v247 = vld [vmem:[%s1 + $0x28] sm:$0xf]
      %v248 = vld [vmem:[%s1 + $0x2c] sm:$0xf]
      %v249 = vld [vmem:[%s1 + $0x30] sm:$0xf]
      %v250 = vld [vmem:[%s1 + $0x34] sm:$0xf]
      %v251 = vld [vmem:[%s1 + $0x38] sm:$0xf]
      %v252 = vld [vmem:[%s1 + $0x3c] sm:$0xf]
      %v253 = vld [vmem:[%s1 + $0x40] sm:$0xf]
      %v254 = vld [vmem:[%s1 + $0x44] sm:$0xf]
      %v255 = vld [vmem:[%s1 + $0x48] sm:$0xf]
      %v256 = vld [vmem:[%s1 + $0x4c] sm:$0xf]
      %v257 = vld [vmem:[%s1 + $0x50] sm:$0xf]
      %v258 = vld [vmem:[%s1 + $0x54] sm:$0xf]
      %v259 = vld [vmem:[%s1 + $0x58] sm:$0xf]
      %v260 = vld [vmem:[%s1 + $0x5c] sm:$0xf]
      %v261 = vld [vmem:[%s1 + $0x60] sm:$0xf]
      %v262 = vld [vmem:[%s1 + $0x64] sm:$0xf]
      %v263 = vld [vmem:[%s1 + $0x68] sm:$0xf]
      %v264 = vld [vmem:[%s1 + $0x6c] sm:$0xf]
      %v265 = vld [vmem:[%s1 + $0x70] sm:$0xf]
      %v266 = vld [vmem:[%s1 + $0x74] sm:$0xf]
      %v267 = vld [vmem:[%s1 + $0x78] sm:$0xf]
      %v268 = vld [vmem:[%s1 + $0x7c] sm:$0xf]
      %v269 = vld [vmem:[%s1 + $0x80] sm:$0xf]
      %v270 = vld [vmem:[%s1 + $0x84] sm:$0xf]
      %v271 = vld [vmem:[%s1 + $0x88] sm:$0xf]
      %v272 = vld [vmem:[%s1 + $0x8c] sm:$0xf]
      %v273 = vld [vmem:[%s1 + $0x90] sm:$0xf]
      %v274 = vld [vmem:[%s1 + $0x94] sm:$0xf]
      %v275 = vld [vmem:[%s1 + $0x98] sm:$0xf]
      %v276 = vld [vmem:[%s1 + $0x9c] sm:$0xf]
      %v277 = vld [vmem:[%s1 + $0xa0] sm:$0xf]
      %v278 = vld [vmem:[%s1 + $0xa4] sm:$0xf]
      %v279 = vld [vmem:[%s1 + $0xa8] sm:$0xf]
      %v280 = vld [vmem:[%s1 + $0xac] sm:$0xf]
      %v281 = vld [vmem:[%s1 + $0xb0] sm:$0xf]
      %v282 = vld [vmem:[%s1 + $0xb4] sm:$0xf]
      %v283 = vld [vmem:[%s1 + $0xb8] sm:$0xf]
      %v284 = vld [vmem:[%s1 + $0xbc] sm:$0xf]
      %v285 = vld [vmem:[%s1 + $0xc0] sm:$0xf]
      %v286 = vld [vmem:[%s1 + $0xc4] sm:$0xf]
      %v287 = vld [vmem:[%s1 + $0xc8] sm:$0xf]
      %v288 = vld [vmem:[%s1 + $0xcc] sm:$0xf]
      %v289 = vld [vmem:[%s1 + $0xd0] sm:$0xf]
      %v290 = vld [vmem:[%s1 + $0xd4] sm:$0xf]
      %v291 = vld [vmem:[%s1 + $0xd8] sm:$0xf]
      %v292 = vld [vmem:[%s1 + $0xdc] sm:$0xf]
      %v293 = vld [vmem:[%s1 + $0xe0] sm:$0xf]
      %v294 = vld [vmem:[%s1 + $0xe4] sm:$0xf]
      %v295 = vld [vmem:[%s1 + $0xe8] sm:$0xf]
      %v296 = vld [vmem:[%s1 + $0xec] sm:$0xf]
      %v297 = vld [vmem:[%s1 + $0xf0] sm:$0xf]
      %v298 = vld [vmem:[%s1 + $0xf4] sm:$0xf]
      %v299 = vld [vmem:[%s1 + $0xf8] sm:$0xf]
      %v300 = vld [vmem:[%s1 + $0xfc] sm:$0xf]
      %v317 = vunpack.c.l.b16 %v221
      %v318 = vunpack.c.h.b16 %v221
      %v319 = vunpack.c.l.b16 %v222
      %v320 = vunpack.c.h.b16 %v222
      %v321 = vunpack.c.l.b16 %v223
      %v322 = vunpack.c.h.b16 %v223
      %v323 = vunpack.c.l.b16 %v224
      %v324 = vunpack.c.h.b16 %v224
      %v325 = vunpack.c.l.b16 %v225
      %v326 = vunpack.c.h.b16 %v225
      %v327 = vunpack.c.l.b16 %v226
      %v328 = vunpack.c.h.b16 %v226
      %v329 = vunpack.c.l.b16 %v227
      %v330 = vunpack.c.h.b16 %v227
      %v331 = vunpack.c.l.b16 %v228
      %v332 = vunpack.c.h.b16 %v228
      %v333 = vunpack.c.l.b16 %v229
      %v334 = vunpack.c.h.b16 %v229
      %v335 = vunpack.c.l.b16 %v230
      %v336 = vunpack.c.h.b16 %v230
      %v337 = vunpack.c.l.b16 %v231
      %v338 = vunpack.c.h.b16 %v231
      %v339 = vunpack.c.l.b16 %v232
      %v340 = vunpack.c.h.b16 %v232
      %v341 = vunpack.c.l.b16 %v233
      %v342 = vunpack.c.h.b16 %v233
      %v343 = vunpack.c.l.b16 %v234
      %v344 = vunpack.c.h.b16 %v234
      %v345 = vunpack.c.l.b16 %v235
      %v346 = vunpack.c.h.b16 %v235
      %v347 = vunpack.c.l.b16 %v236
      %v348 = vunpack.c.h.b16 %v236
      %v349 = vpack.c.b16 %v321, %v317
      %v350 = vpack.c.b16 %v322, %v318
      %v351 = vpack.c.b16 %v323, %v319
      %v352 = vpack.c.b16 %v324, %v320
      %v353 = vpack.c.b16 %v329, %v325
      %v354 = vpack.c.b16 %v330, %v326
      %v355 = vpack.c.b16 %v331, %v327
      %v356 = vpack.c.b16 %v332, %v328
      %v357 = vpack.c.b16 %v337, %v333
      %v358 = vpack.c.b16 %v338, %v334
      %v359 = vpack.c.b16 %v339, %v335
      %v360 = vpack.c.b16 %v340, %v336
      %v361 = vpack.c.b16 %v345, %v341
      %v362 = vpack.c.b16 %v346, %v342
      %v363 = vpack.c.b16 %v347, %v343
      %v364 = vpack.c.b16 %v348, %v344
      %v445 = vunpack.c.l.b16 %v237
      %v446 = vunpack.c.l.b16 %v238
      %v447 = vunpack.c.l.b16 %v239
      %v448 = vunpack.c.l.b16 %v240
      %v449 = vunpack.c.l.b16 %v241
      %v450 = vunpack.c.l.b16 %v242
      %v451 = vunpack.c.l.b16 %v243
      %v452 = vunpack.c.l.b16 %v244
      %v453 = vunpack.c.l.b16 %v245
      %v454 = vunpack.c.l.b16 %v246
      %v455 = vunpack.c.l.b16 %v247
      %v456 = vunpack.c.l.b16 %v248
      %v457 = vunpack.c.l.b16 %v249
      %v458 = vunpack.c.l.b16 %v250
      %v459 = vunpack.c.l.b16 %v251
      %v460 = vunpack.c.l.b16 %v252
      %v461 = vunpack.c.l.b16 %v253
      %v462 = vunpack.c.l.b16 %v254
      %v463 = vunpack.c.l.b16 %v255
      %v464 = vunpack.c.l.b16 %v256
      %v465 = vunpack.c.l.b16 %v257
      %v466 = vunpack.c.l.b16 %v258
      %v467 = vunpack.c.l.b16 %v259
      %v468 = vunpack.c.l.b16 %v260
      %v469 = vunpack.c.l.b16 %v261
      %v470 = vunpack.c.l.b16 %v262
      %v471 = vunpack.c.l.b16 %v263
      %v472 = vunpack.c.l.b16 %v264
      %v473 = vunpack.c.l.b16 %v265
      %v474 = vunpack.c.l.b16 %v266
      %v475 = vunpack.c.l.b16 %v267
      %v476 = vunpack.c.l.b16 %v268
      %v477 = vunpack.c.l.b16 %v269
      %v478 = vunpack.c.l.b16 %v270
      %v479 = vunpack.c.l.b16 %v271
      %v480 = vunpack.c.l.b16 %v272
      %v481 = vunpack.c.l.b16 %v273
      %v482 = vunpack.c.l.b16 %v274
      %v483 = vunpack.c.l.b16 %v275
      %v484 = vunpack.c.l.b16 %v276
      %v485 = vunpack.c.l.b16 %v277
      %v486 = vunpack.c.l.b16 %v278
      %v487 = vunpack.c.l.b16 %v279
      %v488 = vunpack.c.l.b16 %v280
      %v489 = vunpack.c.l.b16 %v281
      %v490 = vunpack.c.l.b16 %v282
      %v491 = vunpack.c.l.b16 %v283
      %v492 = vunpack.c.l.b16 %v284
      %v493 = vunpack.c.l.b16 %v285
      %v494 = vunpack.c.l.b16 %v286
      %v495 = vunpack.c.l.b16 %v287
      %v496 = vunpack.c.l.b16 %v288
      %v497 = vunpack.c.l.b16 %v289
      %v498 = vunpack.c.l.b16 %v290
      %v499 = vunpack.c.l.b16 %v291
      %v500 = vunpack.c.l.b16 %v292
      %v501 = vunpack.c.l.b16 %v293
      %v502 = vunpack.c.l.b16 %v294
      %v503 = vunpack.c.l.b16 %v295
      %v504 = vunpack.c.l.b16 %v296
      %v505 = vunpack.c.l.b16 %v297
      %v506 = vunpack.c.l.b16 %v298
      %v507 = vunpack.c.l.b16 %v299
      %v508 = vunpack.c.l.b16 %v300
      %v509 = vpack.c.b16 %v446, %v445
      %v510 = vpack.c.b16 %v448, %v447
      %v511 = vpack.c.b16 %v450, %v449
      %v512 = vpack.c.b16 %v452, %v451
      %v513 = vpack.c.b16 %v454, %v453
      %v514 = vpack.c.b16 %v456, %v455
      %v515 = vpack.c.b16 %v458, %v457
      %v516 = vpack.c.b16 %v460, %v459
      %v517 = vpack.c.b16 %v462, %v461
      %v518 = vpack.c.b16 %v464, %v463
      %v519 = vpack.c.b16 %v466, %v465
      %v520 = vpack.c.b16 %v468, %v467
      %v521 = vpack.c.b16 %v470, %v469
      %v522 = vpack.c.b16 %v472, %v471
      %v523 = vpack.c.b16 %v474, %v473
      %v524 = vpack.c.b16 %v476, %v475
      %v525 = vpack.c.b16 %v478, %v477
      %v526 = vpack.c.b16 %v480, %v479
      %v527 = vpack.c.b16 %v482, %v481
      %v528 = vpack.c.b16 %v484, %v483
      %v529 = vpack.c.b16 %v486, %v485
      %v530 = vpack.c.b16 %v488, %v487
      %v531 = vpack.c.b16 %v490, %v489
      %v532 = vpack.c.b16 %v492, %v491
      %v533 = vpack.c.b16 %v494, %v493
      %v534 = vpack.c.b16 %v496, %v495
      %v535 = vpack.c.b16 %v498, %v497
      %v536 = vpack.c.b16 %v500, %v499
      %v537 = vpack.c.b16 %v502, %v501
      %v538 = vpack.c.b16 %v504, %v503
      %v539 = vpack.c.b16 %v506, %v505
      %v540 = vpack.c.b16 %v508, %v507
      %573 = vmatpush.bf16.msra.mxu0 %v516
      %574 = vmatpush.bf16.msra.mxu0 %v515
      %575 = vmatpush.bf16.msra.mxu0 %v514
      %576 = vmatpush.bf16.msra.mxu0 %v513
      %577 = vmatpush.bf16.msra.mxu0 %v512
      %578 = vmatpush.bf16.msra.mxu0 %v511
      %579 = vmatpush.bf16.msra.mxu0 %v510
      %580 = vmatpush.bf16.msra.mxu0 %v509
      %581 = vmatmul.bf16.gmra.mxu0 %v349
      %v582 = vpop.f32.mrf.mxu0
      %v583 = vadd.f32 0.0, %v582
      %v584 = vpop.f32.mrf.mxu0
      %v585 = vadd.f32 0.0, %v584
      %586 = vmatmul.bf16.gmra.mxu0 %v353
      %v587 = vpop.f32.mrf.mxu0
      %v588 = vadd.f32 0.0, %v587
      %v589 = vpop.f32.mrf.mxu0
      %v590 = vadd.f32 0.0, %v589
      %591 = vmatmul.bf16.gmra.mxu0 %v357
      %v592 = vpop.f32.mrf.mxu0
      %v593 = vadd.f32 0.0, %v592
      %v594 = vpop.f32.mrf.mxu0
      %v595 = vadd.f32 0.0, %v594
      %596 = vmatmul.bf16.gmra.mxu0 %v361
      %v597 = vpop.f32.mrf.mxu0
      %v598 = vadd.f32 0.0, %v597
      %v599 = vpop.f32.mrf.mxu0
      %v600 = vadd.f32 0.0, %v599
      %601 = vdwg.mxu0
      %602 = vmatpush.bf16.msra.mxu0 %v524
      %603 = vmatpush.bf16.msra.mxu0 %v523
      %604 = vmatpush.bf16.msra.mxu0 %v522
      %605 = vmatpush.bf16.msra.mxu0 %v521
      %606 = vmatpush.bf16.msra.mxu0 %v520
      %607 = vmatpush.bf16.msra.mxu0 %v519
      %608 = vmatpush.bf16.msra.mxu0 %v518
      %609 = vmatpush.bf16.msra.mxu0 %v517
      %610 = vmatmul.bf16.gmra.mxu0 %v350
      %v611 = vpop.f32.mrf.mxu0
      %v612 = vadd.f32 %v583, %v611
      %v613 = vpop.f32.mrf.mxu0
      %v614 = vadd.f32 %v585, %v613
      %615 = vmatmul.bf16.gmra.mxu0 %v354
      %v616 = vpop.f32.mrf.mxu0
      %v617 = vadd.f32 %v588, %v616
      %v618 = vpop.f32.mrf.mxu0
      %v619 = vadd.f32 %v590, %v618
      %620 = vmatmul.bf16.gmra.mxu0 %v358
      %v621 = vpop.f32.mrf.mxu0
      %v622 = vadd.f32 %v593, %v621
      %v623 = vpop.f32.mrf.mxu0
      %v624 = vadd.f32 %v595, %v623
      %625 = vmatmul.bf16.gmra.mxu0 %v362
      %v626 = vpop.f32.mrf.mxu0
      %v627 = vadd.f32 %v598, %v626
      %v628 = vpop.f32.mrf.mxu0
      %v629 = vadd.f32 %v600, %v628
      %630 = vdwg.mxu0
      %631 = vmatpush.bf16.msra.mxu0 %v532
      %632 = vmatpush.bf16.msra.mxu0 %v531
      %633 = vmatpush.bf16.msra.mxu0 %v530
      %634 = vmatpush.bf16.msra.mxu0 %v529
      %635 = vmatpush.bf16.msra.mxu0 %v528
      %636 = vmatpush.bf16.msra.mxu0 %v527
      %637 = vmatpush.bf16.msra.mxu0 %v526
      %638 = vmatpush.bf16.msra.mxu0 %v525
      %639 = vmatmul.bf16.gmra.mxu0 %v351
      %v640 = vpop.f32.mrf.mxu0
      %v641 = vadd.f32 %v612, %v640
      %v642 = vpop.f32.mrf.mxu0
      %v643 = vadd.f32 %v614, %v642
      %644 = vmatmul.bf16.gmra.mxu0 %v355
      %v645 = vpop.f32.mrf.mxu0
      %v646 = vadd.f32 %v617, %v645
      %v647 = vpop.f32.mrf.mxu0
      %v648 = vadd.f32 %v619, %v647
      %649 = vmatmul.bf16.gmra.mxu0 %v359
      %v650 = vpop.f32.mrf.mxu0
      %v651 = vadd.f32 %v622, %v650
      %v652 = vpop.f32.mrf.mxu0
      %v653 = vadd.f32 %v624, %v652
      %654 = vmatmul.bf16.gmra.mxu0 %v363
      %v655 = vpop.f32.mrf.mxu0
      %v656 = vadd.f32 %v627, %v655
      %v657 = vpop.f32.mrf.mxu0
      %v658 = vadd.f32 %v629, %v657
      %659 = vdwg.mxu0
      %660 = vmatpush.bf16.msra.mxu0 %v540
      %661 = vmatpush.bf16.msra.mxu0 %v539
      %662 = vmatpush.bf16.msra.mxu0 %v538
      %663 = vmatpush.bf16.msra.mxu0 %v537
      %664 = vmatpush.bf16.msra.mxu0 %v536
      %665 = vmatpush.bf16.msra.mxu0 %v535
      %666 = vmatpush.bf16.msra.mxu0 %v534
      %667 = vmatpush.bf16.msra.mxu0 %v533
      %668 = vmatmul.bf16.gmra.mxu0 %v352
      %v669 = vpop.f32.mrf.mxu0
      %v670 = vadd.f32 %v641, %v669
      %v671 = vpop.f32.mrf.mxu0
      %v672 = vadd.f32 %v643, %v671
      %673 = vmatmul.bf16.gmra.mxu0 %v356
      %v674 = vpop.f32.mrf.mxu0
      %v675 = vadd.f32 %v646, %v674
      %v676 = vpop.f32.mrf.mxu0
      %v677 = vadd.f32 %v648, %v676
      %678 = vmatmul.bf16.gmra.mxu0 %v360
      %v679 = vpop.f32.mrf.mxu0
      %v680 = vadd.f32 %v651, %v679
      %v681 = vpop.f32.mrf.mxu0
      %v682 = vadd.f32 %v653, %v681
      %683 = vmatmul.bf16.gmra.mxu0 %v364
      %v684 = vpop.f32.mrf.mxu0
      %v685 = vadd.f32 %v656, %v684
      %v686 = vpop.f32.mrf.mxu0
      %v687 = vadd.f32 %v658, %v686
      %688 = vdwg.mxu0
      %v689 = vpack.c.bf16 %v670, %v670
      %v690 = vpack.c.bf16 %v672, %v672
      %v691 = vpack.c.bf16 %v675, %v675
      %v692 = vpack.c.bf16 %v677, %v677
      %v693 = vpack.c.bf16 %v680, %v680
      %v694 = vpack.c.bf16 %v682, %v682
      %v695 = vpack.c.bf16 %v685, %v685
      %v696 = vpack.c.bf16 %v687, %v687
      %697 = vst [vmem:[%s213] sm:$0xf] %v689
      %698 = vst [vmem:[%s213 + $0x4] sm:$0xf] %v690
      %699 = vst [vmem:[%s213 + $0x8] sm:$0xf] %v691
      %700 = vst [vmem:[%s213 + $0xc] sm:$0xf] %v692
      %701 = vst [vmem:[%s213 + $0x10] sm:$0xf] %v693
      %702 = vst [vmem:[%s213 + $0x14] sm:$0xf] %v694
      %703 = vst [vmem:[%s213 + $0x18] sm:$0xf] %v695
      %704 = vst [vmem:[%s213 + $0x1c] sm:$0xf] %v696
      %v705 = vadd.f32 %v670, %v672
      %v706 = vadd.f32 %v705, %v675
      %v707 = vadd.f32 %v706, %v677
      %v708 = vadd.f32 %v707, %v680
      %v709 = vadd.f32 %v708, %v682
      %v710 = vadd.f32 %v709, %v685
      %v711 = vadd.f32 %v710, %v687
      %v712 = vrot.slane %v711, 4
      %v713 = vadd.f32 %v711, %v712
      %v714 = vrot.slane %v713, 2
      %v715 = vadd.f32 %v713, %v714
      %v716 = vrot.slane %v715, 1
      %v717 = vadd.f32 %v715, %v716
      %718 = vst [vmem:[%s217] sm:$0x1] %v717
      %v719 = vmul.f32 %v670, %v670
      %v720 = vmul.f32 %v672, %v672
      %v721 = vmul.f32 %v675, %v675
      %v722 = vmul.f32 %v677, %v677
      %v723 = vmul.f32 %v680, %v680
      %v724 = vmul.f32 %v682, %v682
      %v725 = vmul.f32 %v685, %v685
      %v726 = vmul.f32 %v687, %v687
      %v727 = vadd.f32 %v719, %v720
      %v728 = vadd.f32 %v727, %v721
      %v729 = vadd.f32 %v728, %v722
      %v730 = vadd.f32 %v729, %v723
      %v731 = vadd.f32 %v730, %v724
      %v732 = vadd.f32 %v731, %v725
      %v733 = vadd.f32 %v732, %v726
      %v734 = vrot.slane %v733, 4
      %v735 = vadd.f32 %v733, %v734
      %v736 = vrot.slane %v735, 2
      %v737 = vadd.f32 %v735, %v736
      %v738 = vrot.slane %v737, 1
      %v739 = vadd.f32 %v737, %v738
      %740 = vst [vmem:[%s220] sm:$0x1] %v739
      %s741 = smul.u32 8, %s16
      %p742 = scmp.lt.s32.totalorder %s741, 15
      %s743 = scalar_select %p742, %s741, 15
      %s744 = smul.addr %s743, 4
      %s745 = scalar_lea.vmem %s2, %s744
      %p746 = scmp.lt.s32.totalorder %s16, 1
      %s747 = scalar_select %p746, %s16, 1
      %s748 = scalar_lea.vmem %s3, %s747
      %p749 = scmp.lt.s32.totalorder %s16, 1
      %s750 = scalar_select %p749, %s16, 1
      %s751 = scalar_lea.vmem %s4, %s750
      // Predicated region
      $region29: #{down_c_forward.4} parent=27 // pred_check
        %p752 = pneg %p81
      $region30: #{down_c_forward.4} parent=27 // pred_check_branch
        %754 = sbr.rel (%p752) target = $region32
      $region31: #{down_c_forward.4} parent=27 // pred_region
        %s755 = smul.u32 8, %s16
      $region32: #{down_c_forward.4} parent=27 // pred_fallthru
        _
      // Predicated region
      $region33: #{down_c_forward.4} parent=27 // pred_check
        %p756 = pneg %p107
      $region34: #{down_c_forward.4} parent=27 // pred_check_branch
        %758 = sbr.rel (%p756) target = $region36
      $region35: #{down_c_forward.4} parent=27 // pred_region
        _
      $region36: #{down_c_forward.4} parent=27 // pred_fallthru
        _
      // Predicated region
      $region37: #{down_c_forward.4} parent=27 // pred_check
        %p759 = pneg %p133
      $region38: #{down_c_forward.4} parent=27 // pred_check_branch
        %761 = sbr.rel (%p759) target = $region40
      $region39: #{down_c_forward.4} parent=27 // pred_region
        _
      $region40: #{down_c_forward.4} parent=27 // pred_fallthru
        _
    $region28: #{down_c_forward.4} parent=5 // pred_fallthru
      _
    %p762 = scmp.le.s32.totalorder 2, %s11
    // Predicated region
    $region41: #{down_c_forward.4} parent=5 // pred_check
      %p763 = pneg %p762
    $region42: #{down_c_forward.4} parent=5 // pred_check_branch
      %765 = sbr.rel (%p763) target = $region44
    $region43: #{down_c_forward.4} parent=5 // pred_region
      %s766 = ssub.s32 %s11, 2
      // Predicated region
      $region45: #{down_c_forward.4} parent=43 // pred_check
        %p767 = pneg %p87
      $region46: #{down_c_forward.4} parent=43 // pred_check_branch
        %769 = sbr.rel (%p767) target = $region48
      $region47: #{down_c_forward.4} parent=43 // pred_region
        %s770 = smul.u32 8, %s17
        %p771 = scmp.lt.s32.totalorder %s770, 15
        %s772 = scalar_select %p771, %s770, 15
        %s773 = smul.addr %s772, 4
        %s774 = scalar_lea.vmem %s2, %s773
      $region48: #{down_c_forward.4} parent=43 // pred_fallthru
        _
      // Predicated region
      $region49: #{down_c_forward.4} parent=43 // pred_check
        %p775 = pneg %p113
      $region50: #{down_c_forward.4} parent=43 // pred_check_branch
        %777 = sbr.rel (%p775) target = $region52
      $region51: #{down_c_forward.4} parent=43 // pred_region
        %p778 = scmp.lt.s32.totalorder %s17, 1
        %s779 = scalar_select %p778, %s17, 1
        %s780 = scalar_lea.vmem %s3, %s779
      $region52: #{down_c_forward.4} parent=43 // pred_fallthru
        _
      // Predicated region
      $region53: #{down_c_forward.4} parent=43 // pred_check
        %p781 = pneg %p139
      $region54: #{down_c_forward.4} parent=43 // pred_check_branch
        %783 = sbr.rel (%p781) target = $region56
      $region55: #{down_c_forward.4} parent=43 // pred_region
        %p784 = scmp.lt.s32.totalorder %s17, 1
        %s785 = scalar_select %p784, %s17, 1
        %s786 = scalar_lea.vmem %s4, %s785
      $region56: #{down_c_forward.4} parent=43 // pred_fallthru
        _
    $region44: #{down_c_forward.4} parent=5 // pred_fallthru
      _
  $region6: #{down_c_forward.4} parent=0 // loop_footer
    %s15 = sadd.s32 1, %s11
  $region7: #{down_c_forward.4} parent=0 // loop_footer_branch
    %10 = sbr.rel target = $region3
  $region8: #{down_c_forward.4} parent=0 // loop_exit
    _

// kernel: down_c_forward.5
$region0: #{down_c_forward.5}
  #allocation0 [shape = 'u32[]', space=smem, size = 0x4, offset = 0x4, fixed_abs, tag = 'smem constant byte address 0x4 - core index']
  #allocation1 [shape = 'u32[72,128]{1,0:T(1,128)}', space=vmem, size = 0x9000, scoped, tag = 'internal scratch']
  %s0 = inlined_call_operand.vmem [shape: bf16[128,128], index: 0, kind: input, shape index: {}]
  %s1 = inlined_call_operand.vmem [shape: f32[1,128], index: 1, kind: input, shape index: {}]
  %s2 = inlined_call_operand.vmem [shape: f32[1,128], index: 2, kind: input, shape index: {}]
  %s3 = inlined_call_operand.vmem [shape: bf16[128,128], index: 3, kind: input, shape index: {}]
  %s4 = inlined_call_operand.vmem [shape: f32[1,128], index: 4, kind: input, shape index: {}]
  %s5 = inlined_call_operand.vmem [shape: f32[1,128], index: 5, kind: input, shape index: {}]
  %s6 = inlined_call_operand.vmem [shape: f32[128,128], index: 6, kind: output, shape index: {}]
  %s7 = sld [smem:[#allocation0]]
  $region57: #{down_c_forward.5} parent=0
    _
  %s9 = ssub.s32 1, %s7
  %s10 = scalar_select 0, %s9, %s7
  loop: start=0, step=1, limit=4
  $region2: #{down_c_forward.5} parent=0 // loop_pre_header
    _
  $region3: #{down_c_forward.5} parent=0 // loop_header
    %s12 = sphi 0, %s16
    %p13 = scmp.ge.s32.totalorder %s12, 4
    %s22 = sphi 0, %s24
    %s25 = sphi 0, %s22
    %s26 = sphi 0, %s25
    %s42 = sphi 0, %s26
    %s46 = sphi 0, %s46
    %s48 = sphi 0, %s46
    %s49 = sphi 0, %s48
    %s63 = sphi 0, %s49
    %s67 = sphi 0, %s67
    %s69 = sphi 0, %s67
    %s70 = sphi 0, %s69
    %s84 = sphi 0, %s70
    %s90 = sphi 0, %s92
    %s93 = sphi 0, %s90
    %s94 = sphi 0, %s93
    %s110 = sphi 0, %s94
    %s114 = sphi 0, %s114
    %s116 = sphi 0, %s114
    %s117 = sphi 0, %s116
    %s131 = sphi 0, %s117
    %s135 = sphi 0, %s135
    %s137 = sphi 0, %s135
    %s138 = sphi 0, %s137
    %s152 = sphi 0, %s138
    %s158 = sphi 0, %s160
    %s161 = sphi 0, %s158
    %s162 = sphi 0, %s161
    %s178 = sphi 0, %s162
  $region4: #{down_c_forward.5} parent=0 // loop_header_branch
    %15 = sbr.rel (%p13) target = $region8
  $region5: #{down_c_forward.5} parent=0 // loop_body
    %s17 = ssub.s32 %s12, 1
    %s18 = ssub.s32 %s12, 2
    %s19 = sadd.s32 %s12, 1
    %s20 = ssub.s32 %s12, %s19
    %p21 = scmp.eq.s32.totalorder %s20, 0
    %s23 = sadd.s32 %s22, 1
    %s24 = scalar_select %p21, %s22, %s23
    %p27 = pneg %p21
    %p28 = scmp.eq.s32.totalorder %s12, 1
    %p29 = por %p27, %p28
    %p30 = scmp.ne.s32.totalorder %s22, %s25
    %p31 = scmp.eq.s32.totalorder %s12, 0
    %p32 = por %p30, %p31
    %p33 = scmp.ne.s32.totalorder %s22, %s25
    %p34 = scmp.eq.s32.totalorder %s17, 1
    %p35 = por %p33, %p34
    %p36 = scmp.ne.s32.totalorder %s25, %s26
    %p37 = scmp.eq.s32.totalorder %s17, 0
    %p38 = por %p36, %p37
    %p39 = scmp.ne.s32.totalorder %s25, %s26
    %p40 = scmp.eq.s32.totalorder %s18, 1
    %p41 = por %p39, %p40
    %p43 = scmp.ne.s32.totalorder %s26, %s42
    %p44 = scmp.eq.s32.totalorder %s18, 0
    %p45 = por %p43, %p44
    %s47 = sadd.s32 %s46, 1
    %p50 = scmp.eq.s32.totalorder %s12, 1
    %p51 = scmp.ne.s32.totalorder %s46, %s48
    %p52 = scmp.eq.s32.totalorder %s12, 0
    %p53 = por %p51, %p52
    %p54 = scmp.ne.s32.totalorder %s46, %s48
    %p55 = scmp.eq.s32.totalorder %s17, 1
    %p56 = por %p54, %p55
    %p57 = scmp.ne.s32.totalorder %s48, %s49
    %p58 = scmp.eq.s32.totalorder %s17, 0
    %p59 = por %p57, %p58
    %p60 = scmp.ne.s32.totalorder %s48, %s49
    %p61 = scmp.eq.s32.totalorder %s18, 1
    %p62 = por %p60, %p61
    %p64 = scmp.ne.s32.totalorder %s49, %s63
    %p65 = scmp.eq.s32.totalorder %s18, 0
    %p66 = por %p64, %p65
    %s68 = sadd.s32 %s67, 1
    %p71 = scmp.eq.s32.totalorder %s12, 1
    %p72 = scmp.ne.s32.totalorder %s67, %s69
    %p73 = scmp.eq.s32.totalorder %s12, 0
    %p74 = por %p72, %p73
    %p75 = scmp.ne.s32.totalorder %s67, %s69
    %p76 = scmp.eq.s32.totalorder %s17, 1
    %p77 = por %p75, %p76
    %p78 = scmp.ne.s32.totalorder %s69, %s70
    %p79 = scmp.eq.s32.totalorder %s17, 0
    %p80 = por %p78, %p79
    %p81 = scmp.ne.s32.totalorder %s69, %s70
    %p82 = scmp.eq.s32.totalorder %s18, 1
    %p83 = por %p81, %p82
    %p85 = scmp.ne.s32.totalorder %s70, %s84
    %p86 = scmp.eq.s32.totalorder %s18, 0
    %p87 = por %p85, %p86
    %s88 = ssub.s32 %s12, %s19
    %p89 = scmp.eq.s32.totalorder %s88, 0
    %s91 = sadd.s32 %s90, 1
    %s92 = scalar_select %p89, %s90, %s91
    %p95 = pneg %p89
    %p96 = scmp.eq.s32.totalorder %s12, 1
    %p97 = por %p95, %p96
    %p98 = scmp.ne.s32.totalorder %s90, %s93
    %p99 = scmp.eq.s32.totalorder %s12, 0
    %p100 = por %p98, %p99
    %p101 = scmp.ne.s32.totalorder %s90, %s93
    %p102 = scmp.eq.s32.totalorder %s17, 1
    %p103 = por %p101, %p102
    %p104 = scmp.ne.s32.totalorder %s93, %s94
    %p105 = scmp.eq.s32.totalorder %s17, 0
    %p106 = por %p104, %p105
    %p107 = scmp.ne.s32.totalorder %s93, %s94
    %p108 = scmp.eq.s32.totalorder %s18, 1
    %p109 = por %p107, %p108
    %p111 = scmp.ne.s32.totalorder %s94, %s110
    %p112 = scmp.eq.s32.totalorder %s18, 0
    %p113 = por %p111, %p112
    %s115 = sadd.s32 %s114, 1
    %p118 = scmp.eq.s32.totalorder %s12, 1
    %p119 = scmp.ne.s32.totalorder %s114, %s116
    %p120 = scmp.eq.s32.totalorder %s12, 0
    %p121 = por %p119, %p120
    %p122 = scmp.ne.s32.totalorder %s114, %s116
    %p123 = scmp.eq.s32.totalorder %s17, 1
    %p124 = por %p122, %p123
    %p125 = scmp.ne.s32.totalorder %s116, %s117
    %p126 = scmp.eq.s32.totalorder %s17, 0
    %p127 = por %p125, %p126
    %p128 = scmp.ne.s32.totalorder %s116, %s117
    %p129 = scmp.eq.s32.totalorder %s18, 1
    %p130 = por %p128, %p129
    %p132 = scmp.ne.s32.totalorder %s117, %s131
    %p133 = scmp.eq.s32.totalorder %s18, 0
    %p134 = por %p132, %p133
    %s136 = sadd.s32 %s135, 1
    %p139 = scmp.eq.s32.totalorder %s12, 1
    %p140 = scmp.ne.s32.totalorder %s135, %s137
    %p141 = scmp.eq.s32.totalorder %s12, 0
    %p142 = por %p140, %p141
    %p143 = scmp.ne.s32.totalorder %s135, %s137
    %p144 = scmp.eq.s32.totalorder %s17, 1
    %p145 = por %p143, %p144
    %p146 = scmp.ne.s32.totalorder %s137, %s138
    %p147 = scmp.eq.s32.totalorder %s17, 0
    %p148 = por %p146, %p147
    %p149 = scmp.ne.s32.totalorder %s137, %s138
    %p150 = scmp.eq.s32.totalorder %s18, 1
    %p151 = por %p149, %p150
    %p153 = scmp.ne.s32.totalorder %s138, %s152
    %p154 = scmp.eq.s32.totalorder %s18, 0
    %p155 = por %p153, %p154
    %s156 = ssub.s32 %s12, %s19
    %p157 = scmp.eq.s32.totalorder %s156, 0
    %s159 = sadd.s32 %s158, 1
    %s160 = scalar_select %p157, %s158, %s159
    %p163 = pneg %p157
    %p164 = scmp.eq.s32.totalorder %s12, 1
    %p165 = por %p163, %p164
    %p166 = scmp.ne.s32.totalorder %s158, %s161
    %p167 = scmp.eq.s32.totalorder %s12, 0
    %p168 = por %p166, %p167
    %p169 = scmp.ne.s32.totalorder %s158, %s161
    %p170 = scmp.eq.s32.totalorder %s17, 1
    %p171 = por %p169, %p170
    %p172 = scmp.ne.s32.totalorder %s161, %s162
    %p173 = scmp.eq.s32.totalorder %s17, 0
    %p174 = por %p172, %p173
    %p175 = scmp.ne.s32.totalorder %s161, %s162
    %p176 = scmp.eq.s32.totalorder %s18, 1
    %p177 = por %p175, %p176
    %p179 = scmp.ne.s32.totalorder %s162, %s178
    %p180 = scmp.eq.s32.totalorder %s18, 0
    %p181 = por %p179, %p180
    %p182 = scmp.le.s32.totalorder 1, %s12
    %p183 = scmp.lt.s32.totalorder %s12, 3
    %p184 = pnand %p182, %p183
    %p185 = pneg %p184
    // Predicated region
    $region9: #{down_c_forward.5} parent=5 // pred_check
      _
    $region10: #{down_c_forward.5} parent=5 // pred_check_branch
      %187 = sbr.rel (%p184) target = $region12
    $region11: #{down_c_forward.5} parent=5 // pred_region
      %s188 = ssub.s32 %s12, 1
      // Predicated region
      $region13: #{down_c_forward.5} parent=11 // pred_check
        %p189 = pneg %p59
      $region14: #{down_c_forward.5} parent=11 // pred_check_branch
        %191 = sbr.rel (%p189) target = $region16
      $region15: #{down_c_forward.5} parent=11 // pred_region
        _
      $region16: #{down_c_forward.5} parent=11 // pred_fallthru
        _
      // Predicated region
      $region17: #{down_c_forward.5} parent=11 // pred_check
        %p192 = pneg %p80
      $region18: #{down_c_forward.5} parent=11 // pred_check_branch
        %194 = sbr.rel (%p192) target = $region20
      $region19: #{down_c_forward.5} parent=11 // pred_region
        _
      $region20: #{down_c_forward.5} parent=11 // pred_fallthru
        _
      // Predicated region
      $region21: #{down_c_forward.5} parent=11 // pred_check
        %p195 = pneg %p127
      $region22: #{down_c_forward.5} parent=11 // pred_check_branch
        %197 = sbr.rel (%p195) target = $region24
      $region23: #{down_c_forward.5} parent=11 // pred_region
        _
      $region24: #{down_c_forward.5} parent=11 // pred_fallthru
        _
      // Predicated region
      $region25: #{down_c_forward.5} parent=11 // pred_check
        %p198 = pneg %p148
      $region26: #{down_c_forward.5} parent=11 // pred_check_branch
        %200 = sbr.rel (%p198) target = $region28
      $region27: #{down_c_forward.5} parent=11 // pred_region
        _
      $region28: #{down_c_forward.5} parent=11 // pred_fallthru
        _
    $region12: #{down_c_forward.5} parent=5 // pred_fallthru
      _
    %p201 = scmp.lt.s32.totalorder %s12, 2
    // Predicated region
    $region29: #{down_c_forward.5} parent=5 // pred_check
      %p202 = pneg %p201
    $region30: #{down_c_forward.5} parent=5 // pred_check_branch
      %204 = sbr.rel (%p202) target = $region32
    $region31: #{down_c_forward.5} parent=5 // pred_region
      // Predicated region
      $region33: #{down_c_forward.5} parent=31 // pred_check
        %p205 = pneg %p32
      $region34: #{down_c_forward.5} parent=31 // pred_check_branch
        %207 = sbr.rel (%p205) target = $region36
      $region35: #{down_c_forward.5} parent=31 // pred_region
        %s208 = smul.u32 8, %s12
        %p209 = scmp.lt.s32.totalorder %s208, 15
        %s210 = scalar_select %p209, %s208, 15
        %s211 = smul.addr %s210, 4
        %s212 = scalar_lea.vmem %s0, %s211
        %s213 = smul.u32 8, %s12
      $region36: #{down_c_forward.5} parent=31 // pred_fallthru
        _
      // Predicated region
      $region37: #{down_c_forward.5} parent=31 // pred_check
        %p214 = pneg %p100
      $region38: #{down_c_forward.5} parent=31 // pred_check_branch
        %216 = sbr.rel (%p214) target = $region40
      $region39: #{down_c_forward.5} parent=31 // pred_region
        %s217 = smul.u32 8, %s12
        %p218 = scmp.lt.s32.totalorder %s217, 15
        %s219 = scalar_select %p218, %s217, 15
        %s220 = smul.addr %s219, 4
        %s221 = scalar_lea.vmem %s3, %s220
        %s222 = smul.u32 8, %s12
      $region40: #{down_c_forward.5} parent=31 // pred_fallthru
        _
    $region32: #{down_c_forward.5} parent=5 // pred_fallthru
      _
    %p223 = scmp.le.s32.totalorder 1, %s12
    %p224 = scmp.lt.s32.totalorder %s12, 3
    %p225 = pnand %p223, %p224
    %p226 = pneg %p225
    // Predicated region
    $region41: #{down_c_forward.5} parent=5 // pred_check
      _
    $region42: #{down_c_forward.5} parent=5 // pred_check_branch
      %228 = sbr.rel (%p225) target = $region44
    $region43: #{down_c_forward.5} parent=5 // pred_region
      %s229 = ssub.s32 %s12, 1
      %s230 = smul.u32 8, %s17
      %p231 = scmp.lt.s32.totalorder %s230, 15
      %s232 = scalar_select %p231, %s230, 15
      %s233 = smul.addr %s232, 4
      %s234 = scalar_lea.vmem %s0, %s233
      %p235 = pneg %p38
      %p236 = pneg %p35
      %p237 = pneg %p59
      %p238 = pneg %p56
      %p239 = pneg %p80
      %p240 = pneg %p77
      %s241 = smul.u32 8, %s17
      %p242 = scmp.lt.s32.totalorder %s241, 15
      %s243 = scalar_select %p242, %s241, 15
      %s244 = smul.addr %s243, 4
      %s245 = scalar_lea.vmem %s3, %s244
      %p246 = pneg %p106
      %p247 = pneg %p103
      %p248 = pneg %p127
      %p249 = pneg %p124
      %p250 = pneg %p148
      %p251 = pneg %p145
      %p252 = pneg %p174
      %p253 = pneg %p171
      %s254 = smul.u32 8, %s17
      %p255 = scmp.lt.s32.totalorder %s254, 15
      %s256 = scalar_select %p255, %s254, 15
      %s257 = smul.addr %s256, 8
      %s258 = scalar_lea.vmem %s6, %s257
      %s259 = smul.u32 8, %s17
      %p260 = scmp.lt.s32.totalorder %s259, 15
      %s261 = scalar_select %p260, %s259, 15
      %s262 = smul.addr %s261, 4
      %s263 = scalar_lea.vmem %s0, %s262
      %s264 = smul.u32 8, %s17
      %s265 = smul.u32 8, %s17
      %p266 = scmp.lt.s32.totalorder %s265, 15
      %s267 = scalar_select %p266, %s265, 15
      %s268 = smul.addr %s267, 4
      %s269 = scalar_lea.vmem %s3, %s268
      %s270 = smul.u32 8, %s17
      %s271 = smul.u32 8, %s17
      %p272 = scmp.lt.s32.totalorder %s271, 15
      %s273 = scalar_select %p272, %s271, 15
      %s274 = smul.addr %s273, 8
      %s275 = scalar_lea.vmem %s6, %s274
      %s276 = smul.u32 8, %s17
      %v277 = vld [vmem:[%s263] sm:$0xf]
      %v278 = vld [vmem:[%s263 + $0x4] sm:$0xf]
      %v279 = vld [vmem:[%s263 + $0x8] sm:$0xf]
      %v280 = vld [vmem:[%s263 + $0xc] sm:$0xf]
      %v281 = vld [vmem:[%s263 + $0x10] sm:$0xf]
      %v282 = vld [vmem:[%s263 + $0x14] sm:$0xf]
      %v283 = vld [vmem:[%s263 + $0x18] sm:$0xf]
      %v284 = vld [vmem:[%s263 + $0x1c] sm:$0xf]
      %v285 = vunpack.c.l.bf16 %v277
      %v286 = vunpack.c.l.bf16 %v278
      %v287 = vunpack.c.l.bf16 %v279
      %v288 = vunpack.c.l.bf16 %v280
      %v289 = vunpack.c.l.bf16 %v281
      %v290 = vunpack.c.l.bf16 %v282
      %v291 = vunpack.c.l.bf16 %v283
      %v292 = vunpack.c.l.bf16 %v284
      %v293 = vld [vmem:[%s1] sm:$0x1]
      %v295 = vperm.slane %v293, 0
      %v297 = vmul.f32 %v285, %v295
      %v298 = vmul.f32 %v286, %v295
      %v299 = vmul.f32 %v287, %v295
      %v300 = vmul.f32 %v288, %v295
      %v301 = vmul.f32 %v289, %v295
      %v302 = vmul.f32 %v290, %v295
      %v303 = vmul.f32 %v291, %v295
      %v304 = vmul.f32 %v292, %v295
      %v305 = vld [vmem:[%s2] sm:$0x1]
      %v307 = vperm.slane %v305, 0
      %v309 = vadd.f32 %v297, %v307
      %v310 = vadd.f32 %v298, %v307
      %v311 = vadd.f32 %v299, %v307
      %v312 = vadd.f32 %v300, %v307
      %v313 = vadd.f32 %v301, %v307
      %v314 = vadd.f32 %v302, %v307
      %v315 = vadd.f32 %v303, %v307
      %v316 = vadd.f32 %v304, %v307
      %v317 = vmax.f32 %v309, 0.0
      %v318 = vmax.f32 %v310, 0.0
      %v319 = vmax.f32 %v311, 0.0
      %v320 = vmax.f32 %v312, 0.0
      %v321 = vmax.f32 %v313, 0.0
      %v322 = vmax.f32 %v314, 0.0
      %v323 = vmax.f32 %v315, 0.0
      %v324 = vmax.f32 %v316, 0.0
      %v325 = vld [vmem:[%s269] sm:$0xf]
      %v326 = vld [vmem:[%s269 + $0x4] sm:$0xf]
      %v327 = vld [vmem:[%s269 + $0x8] sm:$0xf]
      %v328 = vld [vmem:[%s269 + $0xc] sm:$0xf]
      %v329 = vld [vmem:[%s269 + $0x10] sm:$0xf]
      %v330 = vld [vmem:[%s269 + $0x14] sm:$0xf]
      %v331 = vld [vmem:[%s269 + $0x18] sm:$0xf]
      %v332 = vld [vmem:[%s269 + $0x1c] sm:$0xf]
      %v333 = vunpack.c.l.bf16 %v325
      %v334 = vunpack.c.l.bf16 %v326
      %v335 = vunpack.c.l.bf16 %v327
      %v336 = vunpack.c.l.bf16 %v328
      %v337 = vunpack.c.l.bf16 %v329
      %v338 = vunpack.c.l.bf16 %v330
      %v339 = vunpack.c.l.bf16 %v331
      %v340 = vunpack.c.l.bf16 %v332
      %v341 = vld [vmem:[%s4] sm:$0x1]
      %v343 = vperm.slane %v341, 0
      %v345 = vmul.f32 %v333, %v343
      %v346 = vmul.f32 %v334, %v343
      %v347 = vmul.f32 %v335, %v343
      %v348 = vmul.f32 %v336, %v343
      %v349 = vmul.f32 %v337, %v343
      %v350 = vmul.f32 %v338, %v343
      %v351 = vmul.f32 %v339, %v343
      %v352 = vmul.f32 %v340, %v343
      %v353 = vld [vmem:[%s5] sm:$0x1]
      %v355 = vperm.slane %v353, 0
      %v357 = vadd.f32 %v345, %v355
      %v358 = vadd.f32 %v346, %v355
      %v359 = vadd.f32 %v347, %v355
      %v360 = vadd.f32 %v348, %v355
      %v361 = vadd.f32 %v349, %v355
      %v362 = vadd.f32 %v350, %v355
      %v363 = vadd.f32 %v351, %v355
      %v364 = vadd.f32 %v352, %v355
      %v365 = vmax.f32 %v357, 0.0
      %v366 = vmax.f32 %v358, 0.0
      %v367 = vmax.f32 %v359, 0.0
      %v368 = vmax.f32 %v360, 0.0
      %v369 = vmax.f32 %v361, 0.0
      %v370 = vmax.f32 %v362, 0.0
      %v371 = vmax.f32 %v363, 0.0
      %v372 = vmax.f32 %v364, 0.0
      %v373 = vadd.f32 %v317, %v365
      %v374 = vadd.f32 %v318, %v366
      %v375 = vadd.f32 %v319, %v367
      %v376 = vadd.f32 %v320, %v368
      %v377 = vadd.f32 %v321, %v369
      %v378 = vadd.f32 %v322, %v370
      %v379 = vadd.f32 %v323, %v371
      %v380 = vadd.f32 %v324, %v372
      %389 = vrot.lane.b32.xlu0 %v365, 120
      %v390 = vpop.permute.xlu0 %389
      %391 = vrot.lane.b32.xlu0 %v366, 120
      %v392 = vpop.permute.xlu0 %391
      %393 = vrot.lane.b32.xlu0 %v367, 120
      %v394 = vpop.permute.xlu0 %393
      %395 = vrot.lane.b32.xlu0 %v368, 120
      %v396 = vpop.permute.xlu0 %395
      %397 = vrot.lane.b32.xlu0 %v369, 120
      %v398 = vpop.permute.xlu0 %397
      %399 = vrot.lane.b32.xlu0 %v370, 120
      %v400 = vpop.permute.xlu0 %399
      %401 = vrot.lane.b32.xlu0 %v371, 120
      %v402 = vpop.permute.xlu0 %401
      %403 = vrot.lane.b32.xlu0 %v372, 120
      %v404 = vpop.permute.xlu0 %403
      %v413 = vadd.f32 %v373, %v390
      %v414 = vadd.f32 %v374, %v392
      %v415 = vadd.f32 %v375, %v394
      %v416 = vadd.f32 %v376, %v396
      %v417 = vadd.f32 %v377, %v398
      %v418 = vadd.f32 %v378, %v400
      %v419 = vadd.f32 %v379, %v402
      %v420 = vadd.f32 %v380, %v404
      %421 = vrot.lane.b32.xlu0 %v365, 112
      %v422 = vpop.permute.xlu0 %421
      %423 = vrot.lane.b32.xlu0 %v366, 112
      %v424 = vpop.permute.xlu0 %423
      %425 = vrot.lane.b32.xlu0 %v367, 112
      %v426 = vpop.permute.xlu0 %425
      %427 = vrot.lane.b32.xlu0 %v368, 112
      %v428 = vpop.permute.xlu0 %427
      %429 = vrot.lane.b32.xlu0 %v369, 112
      %v430 = vpop.permute.xlu0 %429
      %431 = vrot.lane.b32.xlu0 %v370, 112
      %v432 = vpop.permute.xlu0 %431
      %433 = vrot.lane.b32.xlu0 %v371, 112
      %v434 = vpop.permute.xlu0 %433
      %435 = vrot.lane.b32.xlu0 %v372, 112
      %v436 = vpop.permute.xlu0 %435
      %v445 = vadd.f32 %v413, %v422
      %v446 = vadd.f32 %v414, %v424
      %v447 = vadd.f32 %v415, %v426
      %v448 = vadd.f32 %v416, %v428
      %v449 = vadd.f32 %v417, %v430
      %v450 = vadd.f32 %v418, %v432
      %v451 = vadd.f32 %v419, %v434
      %v452 = vadd.f32 %v420, %v436
      %vm453 = vcmask 64512
      %v454 = vsel %vm453, %v445, 0.0
      %v455 = vsel %vm453, %v446, 0.0
      %v456 = vsel %vm453, %v447, 0.0
      %v457 = vsel %vm453, %v448, 0.0
      %v458 = vsel %vm453, %v449, 0.0
      %v459 = vsel %vm453, %v450, 0.0
      %v460 = vsel %vm453, %v451, 0.0
      %v461 = vsel %vm453, %v452, 0.0
      %462 = vst [vmem:[%s275] sm:$0xff] %v454
      %463 = vst [vmem:[%s275 + $0x8] sm:$0xff] %v455
      %464 = vst [vmem:[%s275 + $0x10] sm:$0xff] %v456
      %465 = vst [vmem:[%s275 + $0x18] sm:$0xff] %v457
      %466 = vst [vmem:[%s275 + $0x20] sm:$0xff] %v458
      %467 = vst [vmem:[%s275 + $0x28] sm:$0xff] %v459
      %468 = vst [vmem:[%s275 + $0x30] sm:$0xff] %v460
      %469 = vst [vmem:[%s275 + $0x38] sm:$0xff] %v461
      %s470 = smul.u32 8, %s17
      %p471 = scmp.lt.s32.totalorder %s470, 15
      %s472 = scalar_select %p471, %s470, 15
      %s473 = smul.addr %s472, 8
      %s474 = scalar_lea.vmem %s6, %s473
      // Predicated region
      $region45: #{down_c_forward.5} parent=43 // pred_check
        %p475 = pneg %p171
      $region46: #{down_c_forward.5} parent=43 // pred_check_branch
        %477 = sbr.rel (%p475) target = $region48
      $region47: #{down_c_forward.5} parent=43 // pred_region
        %s478 = smul.u32 8, %s17
      $region48: #{down_c_forward.5} parent=43 // pred_fallthru
        _
    $region44: #{down_c_forward.5} parent=5 // pred_fallthru
      _
    %p479 = scmp.le.s32.totalorder 2, %s12
    // Predicated region
    $region49: #{down_c_forward.5} parent=5 // pred_check
      %p480 = pneg %p479
    $region50: #{down_c_forward.5} parent=5 // pred_check_branch
      %482 = sbr.rel (%p480) target = $region52
    $region51: #{down_c_forward.5} parent=5 // pred_region
      %s483 = ssub.s32 %s12, 2
      // Predicated region
      $region53: #{down_c_forward.5} parent=51 // pred_check
        %p484 = pneg %p177
      $region54: #{down_c_forward.5} parent=51 // pred_check_branch
        %486 = sbr.rel (%p484) target = $region56
      $region55: #{down_c_forward.5} parent=51 // pred_region
        %s487 = smul.u32 8, %s18
        %p488 = scmp.lt.s32.totalorder %s487, 15
        %s489 = scalar_select %p488, %s487, 15
        %s490 = smul.addr %s489, 8
        %s491 = scalar_lea.vmem %s6, %s490
      $region56: #{down_c_forward.5} parent=51 // pred_fallthru
        _
    $region52: #{down_c_forward.5} parent=5 // pred_fallthru
      _
  $region6: #{down_c_forward.5} parent=0 // loop_footer
    %s16 = sadd.s32 1, %s12
  $region7: #{down_c_forward.5} parent=0 // loop_footer_branch
    %11 = sbr.rel target = $region3
  $region8: #{down_c_forward.5} parent=0 // loop_exit
    _

</llo_original>
